<compile_context>
chip_gen: v5e
topology: v5e:2x2
jax: 0.10.0
libtpu: 0.0.40
codegen_flags: <defaults>
</compile_context>

<pallas_src>
import functools
import numpy as np
import jax
import jax.numpy as jnp
from jax.experimental import pallas as pl
from jax.experimental.pallas import tpu as pltpu


# ----------------------------- config ---------------------------------------
VOCAB_SIZE = 128
BLOCK_SIZE = 16          # max sequence length (wpe rows)
N_EMBD = 32
N_HEAD = 4
N_LAYER = 2
LN_EPS = 1e-5

# rows of the packed per-layer f32 parameter array (L, 8, C)
_R_LN1_G, _R_LN1_B, _R_LN2_G, _R_LN2_B = 0, 1, 2, 3
_R_BPROJ, _R_BFC2, _R_LNF_G, _R_LNF_B = 4, 5, 6, 7   # lnf rows read from layer 0 only


# --------------------------- kernel helpers ---------------------------------
def _bf16(x):
    return x.astype(jnp.bfloat16)


def _layernorm(h, g, b, eps=LN_EPS):
    # single-pass LN: var = E[x^2] - mu^2 (one fewer cross-lane reduction)
    mu = jnp.mean(h, axis=-1, keepdims=True)
    var = jnp.maximum(jnp.mean(h * h, axis=-1, keepdims=True) - mu * mu, 0.0)
    return (h - mu) * jax.lax.rsqrt(var + eps) * g + b


def _gelu_erf(u):
    # exact-erf GELU (torch.nn.GELU() default); erf via Abramowitz-Stegun 7.1.26
    # polynomial (|err| < 1.5e-7) -- only exp/mul/add/div, EUP/VPU friendly.
    x = u * 0.7071067811865476
    ax = jnp.abs(x)
    t = 1.0 / (1.0 + 0.3275911 * ax)
    poly = ((((1.061405429 * t - 1.453152027) * t + 1.421413741) * t
             - 0.284496736) * t + 0.254829592) * t
    erf_ax = 1.0 - poly * jnp.exp(-ax * ax)
    erf_x = jnp.where(x >= 0, erf_ax, -erf_ax)
    return 0.5 * u * (1.0 + erf_x)


def _dot_nt(a, b):
    # contract last dims: A @ B^T  (trans_b MXU path)
    return jax.lax.dot_general(a, b, (((1,), (1,)), ((), ())),
                               preferred_element_type=jnp.float32)


def _dot_tn(a, b):
    # contract first dims: A^T @ B  (trans_a MXU path)
    return jax.lax.dot_general(a, b, (((0,), (0,)), ((), ())),
                               preferred_element_type=jnp.float32)


# --------------------------- fused GPT kernel -------------------------------
def gpt_kernel(idx_ref,                      # (T, 1) int32   (this batch element)
               wte2_ref,                      # (2V, C) bf16   [wte_hi ; wte_lo]
               wpe_ref,                       # (BS, C) f32
               pack_ref,                      # (L, 8, C) f32  LN params + small biases
               battn_ref,                     # (L, 3C, 1) f32
               bfc_ref,                       # (L, 1, 4C) f32
               wattn_ref,                     # (L, 3C, C) bf16  (PyTorch (out,in) layout)
               wproj_ref,                     # (L, C, C)  bf16  (stored as W^T: in,out)
               wfc_ref,                       # (L, C, 4C) bf16
               wfc2_ref,                      # (L, 4C, C) bf16
               wlm_ref,                       # (C, V) bf16
               logits_ref,                    # (T, V) f32     (lane-dense output block)
               *, n_head, n_layer, seq):
    T = seq
    V2, C = wte2_ref.shape
    V = V2 // 2
    D = C // n_head
    scale = 1.0 / float(np.sqrt(D))

    pack = pack_ref[...]                                        # (L, 8, C) f32

    # ---- embeddings: bf16 one-hot against stacked hi/lo wte (exact-ish gather)
    ids = idx_ref[...]                                           # (T, 1) int32
    col = jax.lax.broadcasted_iota(jnp.int32, (T, V2), 1)
    hit = jnp.logical_or(col == ids, col == ids + V)             # picks hi row AND lo row
    oh = jnp.where(hit, 1.0, 0.0).astype(jnp.bfloat16)           # (T, 2V)
    tok = jnp.dot(oh, wte2_ref[...],
                  preferred_element_type=jnp.float32)            # hi+lo accumulated in f32
    x = tok + wpe_ref[0:T, :]                                    # (T, C) f32 residual stream

    # ---- transformer blocks (unrolled; static layer indexing) --------------
    for l in range(n_layer):
        pk = pack[l]
        ln1_g, ln1_b = pk[_R_LN1_G:_R_LN1_G + 1, :], pk[_R_LN1_B:_R_LN1_B + 1, :]
        ln2_g, ln2_b = pk[_R_LN2_G:_R_LN2_G + 1, :], pk[_R_LN2_B:_R_LN2_B + 1, :]
        b_proj = pk[_R_BPROJ:_R_BPROJ + 1, :]
        b_fc2 = pk[_R_BFC2:_R_BFC2 + 1, :]

        # ---- attention: x + proj(attn(ln_1(x))) -----------------------------
        h = _bf16(_layernorm(x, ln1_g, ln1_b))                   # (T, C) bf16
        # qkv^T = W_attn @ h^T : heads end up on the SUBLANE axis
        qkvT = _dot_nt(wattn_ref[l], h) + battn_ref[l]           # (3C, T) f32
        qT = _bf16(qkvT[0:C, :] * scale)                         # scale folded into q
        kT = _bf16(qkvT[C:2 * C, :])
        vT = _bf16(qkvT[2 * C:3 * C, :])

        yT_heads = []
        for hh in range(n_head):                                  # sublane slices (cheap)
            r = slice(hh * D, (hh + 1) * D)
            att = _dot_tn(qT[r, :], kT[r, :])                     # (T, T) = (q s) @ k^T
            att = att - jnp.max(att, axis=-1, keepdims=True)
            p = jnp.exp(att)                                      # softmax, no causal mask
            p = p * pl.reciprocal(jnp.sum(p, axis=-1, keepdims=True), approx=True)
            yT_heads.append(_dot_nt(vT[r, :], _bf16(p)))          # (D, T) = (p @ v)^T
        yT = _bf16(jnp.concatenate(yT_heads, axis=0))             # (C, T) sublane concat
        x = x + _dot_tn(yT, wproj_ref[l]) + b_proj                # (T, C)

        # ---- MLP: x + fc2(gelu(fc(ln_2(x)))) --------------------------------
        h2 = _bf16(_layernorm(x, ln2_g, ln2_b))
        u = jnp.dot(h2, wfc_ref[l],
                    preferred_element_type=jnp.float32) + bfc_ref[l]   # (T, 4C)
        u = _gelu_erf(u)
        x = x + jnp.dot(_bf16(u), wfc2_ref[l],
                        preferred_element_type=jnp.float32) + b_fc2

    # ---- final LN + lm_head (V = 128 -> full-lane unmasked stores) ----------
    lnf_g = pack[0, _R_LNF_G:_R_LNF_G + 1, :]
    lnf_b = pack[0, _R_LNF_B:_R_LNF_B + 1, :]
    hf = _bf16(_layernorm(x, lnf_g, lnf_b))
    logits_ref[...] = jnp.dot(hf, wlm_ref[...], preferred_element_type=jnp.float32)


# ----------------------------- wrapper ---------------------------------------
def gpt_forward(params, idx):
    B, T = idx.shape
    assert T <= BLOCK_SIZE and T % 8 == 0
    idx2 = idx.reshape(B * T, 1).astype(jnp.int32)

    ins = [
        idx2,
        params["wte2"], params["wpe"], params["pack"],
        params["b_attn"], params["b_fc"],
        params["w_attn"], params["w_proj"], params["w_fc"], params["w_fc2"],
        params["w_lm"],
    ]

    def full_spec(a):
        return pl.BlockSpec(a.shape, lambda b, _nd=a.ndim: (0,) * _nd)

    in_specs = [pl.BlockSpec((T, 1), lambda b: (b, 0))] + [full_spec(a) for a in ins[1:]]

    grid_spec = pltpu.PrefetchScalarGridSpec(
        num_scalar_prefetch=0,
        grid=(B,),                               # per-batch grid step; parallel on v7x's 2 TCs
        in_specs=in_specs,
        out_specs=pl.BlockSpec((T, VOCAB_SIZE), lambda b: (b, 0)),
    )
    logits = pl.pallas_call(
        functools.partial(gpt_kernel, n_head=N_HEAD, n_layer=N_LAYER, seq=T),
        out_shape=jax.ShapeDtypeStruct((B * T, VOCAB_SIZE), jnp.float32),
        grid_spec=grid_spec,
        compiler_params=pltpu.CompilerParams(
            dimension_semantics=("parallel",)),
    )(*ins)
    return logits.reshape(B, T, VOCAB_SIZE)      # (B, T, vocab); loss path omitted


# --------------------------- parameter init ----------------------------------
def init_params(key):
    C, V, BS, L = N_EMBD, VOCAB_SIZE, BLOCK_SIZE, N_LAYER
    ks = jax.random.split(key, 7)

    def normal(k, shape):
        return (0.02 * jax.random.normal(k, shape)).astype(jnp.float32)

    # token embedding, stored as stacked hi/lo bf16 split (accurate in-kernel gather)
    wte = normal(ks[0], (V, C))
    wte_hi = wte.astype(jnp.bfloat16)
    wte_lo = (wte - wte_hi.astype(jnp.float32)).astype(jnp.bfloat16)
    wte2 = jnp.concatenate([wte_hi, wte_lo], axis=0)             # (2V, C) bf16

    wpe = normal(ks[1], (BS, C))                                  # f32
    w_lm = normal(ks[2], (C, V)).astype(jnp.bfloat16)             # lm_head (no bias, untied)

    w_attn = normal(ks[3], (L, 3 * C, C)).astype(jnp.bfloat16)    # PyTorch (out,in) layout
    w_proj = normal(ks[4], (L, C, C)).astype(jnp.bfloat16)        # stored as W^T (in,out)
    w_fc = normal(ks[5], (L, C, 4 * C)).astype(jnp.bfloat16)      # stored as W^T (in,out)
    w_fc2 = normal(ks[6], (L, 4 * C, C)).astype(jnp.bfloat16)     # stored as W^T (in,out)

    ones_c = jnp.ones((L, C), jnp.float32)
    zeros_c = jnp.zeros((L, C), jnp.float32)
    # packed rows: ln1_g, ln1_b, ln2_g, ln2_b, b_proj, b_fc2, lnf_g, lnf_b
    pack = jnp.stack([ones_c, zeros_c, ones_c, zeros_c,
                      zeros_c, zeros_c, ones_c, zeros_c], axis=1)  # (L, 8, C)

    return {
        "wte2": wte2,
        "wpe": wpe,
        "pack": pack,
        "b_attn": jnp.zeros((L, 3 * C, 1), jnp.float32),
        "b_fc": jnp.zeros((L, 1, 4 * C), jnp.float32),
        "w_attn": w_attn,
        "w_proj": w_proj,
        "w_fc": w_fc,
        "w_fc2": w_fc2,
        "w_lm": w_lm,
    }


# ------------------------------- main -----------------------------------------
if __name__ == "__main__":
    key = jax.random.PRNGKey(0)
    pkey, dkey = jax.random.split(key)
    params = init_params(pkey)

    B, T = 2, 8
    idx = jax.random.randint(dkey, (B, T), 0, VOCAB_SIZE, dtype=jnp.int32)

    logits = gpt_forward(params, idx)
    jax.block_until_ready(logits)
    assert logits.shape == (B, T, VOCAB_SIZE)
    assert bool(jnp.all(jnp.isfinite(logits)))
    print("KERNEL_OK")
</pallas_src>

<mosaic_0001>
module attributes {stable_mosaic.version = 11 : i64} {
  func.func @gpt_kernel(%arg0: i32, %arg1: memref<8x1xi32, #tpu.memory_space<vmem>>, %arg2: memref<256x32xbf16, #tpu.memory_space<vmem>>, %arg3: memref<16x32xf32, #tpu.memory_space<vmem>>, %arg4: memref<2x8x32xf32, #tpu.memory_space<vmem>>, %arg5: memref<2x96x1xf32, #tpu.memory_space<vmem>>, %arg6: memref<2x1x128xf32, #tpu.memory_space<vmem>>, %arg7: memref<2x96x32xbf16, #tpu.memory_space<vmem>>, %arg8: memref<2x32x32xbf16, #tpu.memory_space<vmem>>, %arg9: memref<2x32x128xbf16, #tpu.memory_space<vmem>>, %arg10: memref<2x128x32xbf16, #tpu.memory_space<vmem>>, %arg11: memref<32x128xbf16, #tpu.memory_space<vmem>>, %arg12: memref<8x128xf32, #tpu.memory_space<vmem>>) attributes {dimension_semantics = [#tpu.dimension_semantics<parallel>], iteration_bounds = array<i64: 2>, scalar_prefetch = 0 : i64, scratch_operands = 0 : i64, tpu.core_type = #tpu.core_type<tc>, window_params = [{transform_indices = @transform_0, window_bounds = array<i64: 8, 1>}, {pipeline_mode = #tpu.pipeline_mode<synchronous>, transform_indices = @transform_1, window_bounds = array<i64: 256, 32>}, {pipeline_mode = #tpu.pipeline_mode<synchronous>, transform_indices = @transform_2, window_bounds = array<i64: 16, 32>}, {pipeline_mode = #tpu.pipeline_mode<synchronous>, transform_indices = @transform_3, window_bounds = array<i64: 2, 8, 32>}, {pipeline_mode = #tpu.pipeline_mode<synchronous>, transform_indices = @transform_4, window_bounds = array<i64: 2, 96, 1>}, {pipeline_mode = #tpu.pipeline_mode<synchronous>, transform_indices = @transform_5, window_bounds = array<i64: 2, 1, 128>}, {pipeline_mode = #tpu.pipeline_mode<synchronous>, transform_indices = @transform_6, window_bounds = array<i64: 2, 96, 32>}, {pipeline_mode = #tpu.pipeline_mode<synchronous>, transform_indices = @transform_7, window_bounds = array<i64: 2, 32, 32>}, {pipeline_mode = #tpu.pipeline_mode<synchronous>, transform_indices = @transform_8, window_bounds = array<i64: 2, 32, 128>}, {pipeline_mode = #tpu.pipeline_mode<synchronous>, transform_indices = @transform_9, window_bounds = array<i64: 2, 128, 32>}, {pipeline_mode = #tpu.pipeline_mode<synchronous>, transform_indices = @transform_10, window_bounds = array<i64: 32, 128>}, {transform_indices = @transform_11, window_bounds = array<i64: 8, 128>}]} {
    %c0 = arith.constant 0 : index
    %c0_0 = arith.constant 0 : index
    %c0_1 = arith.constant 0 : index
    %0 = vector.load %arg4[%c0, %c0_0, %c0_1] : memref<2x8x32xf32, #tpu.memory_space<vmem>>, vector<2x8x32xf32>
    %c0_2 = arith.constant 0 : index
    %c0_3 = arith.constant 0 : index
    %1 = vector.load %arg1[%c0_2, %c0_3] : memref<8x1xi32, #tpu.memory_space<vmem>>, vector<8x1xi32>
    %2 = tpu.iota {dimensions = array<i32: 1>} : vector<8x256xi32>
    %3 = vector.broadcast %1 : vector<8x1xi32> to vector<8x256xi32>
    %4 = arith.cmpi eq, %2, %3 : vector<8x256xi32>
    %c128_i32 = arith.constant 128 : i32
    %5 = vector.broadcast %c128_i32 : i32 to vector<8x1xi32>
    %6 = arith.addi %1, %5 : vector<8x1xi32>
    %7 = vector.broadcast %6 : vector<8x1xi32> to vector<8x256xi32>
    %8 = arith.cmpi eq, %2, %7 : vector<8x256xi32>
    %9 = arith.ori %4, %8 : vector<8x256xi1>
    %cst = arith.constant 1.000000e+00 : f32
    %cst_4 = arith.constant 0.000000e+00 : f32
    %10 = vector.broadcast %cst : f32 to vector<8x256xf32>
    %11 = vector.broadcast %cst_4 : f32 to vector<8x256xf32>
    %12 = arith.select %9, %10, %11 : vector<8x256xi1>, vector<8x256xf32>
    %13 = arith.truncf %12 : vector<8x256xf32> to vector<8x256xbf16>
    %c0_5 = arith.constant 0 : index
    %c0_6 = arith.constant 0 : index
    %14 = vector.load %arg2[%c0_5, %c0_6] : memref<256x32xbf16, #tpu.memory_space<vmem>>, vector<256x32xbf16>
    %cst_7 = arith.constant dense<0.000000e+00> : vector<8x32xf32>
    %15 = tpu.matmul %13, %14, %cst_7 {dimension_numbers = #tpu.dot_dimension_numbers<[1], [0], [0], [1], [0, 0, 1, 1], [], []>} : vector<8x256xbf16>, vector<256x32xbf16>, vector<8x32xf32> -> vector<8x32xf32>
    %c0_8 = arith.constant 0 : index
    %c0_9 = arith.constant 0 : index
    %16 = vector.load %arg3[%c0_8, %c0_9] : memref<16x32xf32, #tpu.memory_space<vmem>>, vector<8x32xf32>
    %17 = arith.addf %15, %16 : vector<8x32xf32>
    %18 = vector.extract_strided_slice %0 {offsets = [0, 0, 0], sizes = [1, 8, 32], strides = [1, 1, 1]} : vector<2x8x32xf32> to vector<1x8x32xf32>
    %19 = vector.shape_cast %18 : vector<1x8x32xf32> to vector<8x32xf32>
    %20 = vector.extract_strided_slice %19 {offsets = [0, 0], sizes = [1, 32], strides = [1, 1]} : vector<8x32xf32> to vector<1x32xf32>
    %21 = vector.extract_strided_slice %19 {offsets = [1, 0], sizes = [1, 32], strides = [1, 1]} : vector<8x32xf32> to vector<1x32xf32>
    %22 = vector.extract_strided_slice %19 {offsets = [2, 0], sizes = [1, 32], strides = [1, 1]} : vector<8x32xf32> to vector<1x32xf32>
    %23 = vector.extract_strided_slice %19 {offsets = [3, 0], sizes = [1, 32], strides = [1, 1]} : vector<8x32xf32> to vector<1x32xf32>
    %24 = vector.extract_strided_slice %19 {offsets = [4, 0], sizes = [1, 32], strides = [1, 1]} : vector<8x32xf32> to vector<1x32xf32>
    %25 = vector.extract_strided_slice %19 {offsets = [5, 0], sizes = [1, 32], strides = [1, 1]} : vector<8x32xf32> to vector<1x32xf32>
    %cst_10 = arith.constant dense<0.000000e+00> : vector<8xf32>
    %26 = vector.multi_reduction <add>, %17, %cst_10 [1] : vector<8x32xf32> to vector<8xf32>
    %27 = vector.shape_cast %26 : vector<8xf32> to vector<8x1xf32>
    %cst_11 = arith.constant 3.200000e+01 : f32
    %28 = vector.broadcast %cst_11 : f32 to vector<8x1xf32>
    %29 = arith.divf %27, %28 : vector<8x1xf32>
    %30 = arith.mulf %17, %17 : vector<8x32xf32>
    %cst_12 = arith.constant dense<0.000000e+00> : vector<8xf32>
    %31 = vector.multi_reduction <add>, %30, %cst_12 [1] : vector<8x32xf32> to vector<8xf32>
    %32 = vector.shape_cast %31 : vector<8xf32> to vector<8x1xf32>
    %cst_13 = arith.constant 3.200000e+01 : f32
    %33 = vector.broadcast %cst_13 : f32 to vector<8x1xf32>
    %34 = arith.divf %32, %33 : vector<8x1xf32>
    %35 = arith.mulf %29, %29 : vector<8x1xf32>
    %36 = arith.subf %34, %35 : vector<8x1xf32>
    %cst_14 = arith.constant 0.000000e+00 : f32
    %37 = vector.broadcast %cst_14 : f32 to vector<8x1xf32>
    %38 = arith.maximumf %36, %37 : vector<8x1xf32>
    %39 = vector.broadcast %29 : vector<8x1xf32> to vector<8x32xf32>
    %40 = arith.subf %17, %39 : vector<8x32xf32>
    %cst_15 = arith.constant 9.99999974E-6 : f32
    %41 = vector.broadcast %cst_15 : f32 to vector<8x1xf32>
    %42 = arith.addf %38, %41 : vector<8x1xf32>
    %43 = math.rsqrt %42 : vector<8x1xf32>
    %44 = vector.broadcast %43 : vector<8x1xf32> to vector<8x32xf32>
    %45 = arith.mulf %40, %44 : vector<8x32xf32>
    %46 = vector.broadcast %20 : vector<1x32xf32> to vector<8x32xf32>
    %47 = arith.mulf %45, %46 : vector<8x32xf32>
    %48 = vector.broadcast %21 : vector<1x32xf32> to vector<8x32xf32>
    %49 = arith.addf %47, %48 : vector<8x32xf32>
    %50 = arith.truncf %49 : vector<8x32xf32> to vector<8x32xbf16>
    %c0_16 = arith.constant 0 : index
    %c0_17 = arith.constant 0 : index
    %c0_18 = arith.constant 0 : index
    %51 = vector.load %arg7[%c0_16, %c0_17, %c0_18] : memref<2x96x32xbf16, #tpu.memory_space<vmem>>, vector<1x96x32xbf16>
    %52 = vector.shape_cast %51 : vector<1x96x32xbf16> to vector<96x32xbf16>
    %cst_19 = arith.constant dense<0.000000e+00> : vector<96x8xf32>
    %53 = tpu.matmul %52, %50, %cst_19 {dimension_numbers = #tpu.dot_dimension_numbers<[1], [1], [0], [0], [0, 0, 1, 0], [], []>} : vector<96x32xbf16>, vector<8x32xbf16>, vector<96x8xf32> -> vector<96x8xf32>
    %c0_20 = arith.constant 0 : index
    %c0_21 = arith.constant 0 : index
    %c0_22 = arith.constant 0 : index
    %54 = vector.load %arg5[%c0_20, %c0_21, %c0_22] : memref<2x96x1xf32, #tpu.memory_space<vmem>>, vector<1x96x1xf32>
    %55 = vector.shape_cast %54 : vector<1x96x1xf32> to vector<96x1xf32>
    %56 = vector.broadcast %55 : vector<96x1xf32> to vector<96x8xf32>
    %57 = arith.addf %53, %56 : vector<96x8xf32>
    %58 = vector.extract_strided_slice %57 {offsets = [0, 0], sizes = [32, 8], strides = [1, 1]} : vector<96x8xf32> to vector<32x8xf32>
    %cst_23 = arith.constant 0.353553385 : f32
    %59 = vector.broadcast %cst_23 : f32 to vector<32x8xf32>
    %60 = arith.mulf %58, %59 : vector<32x8xf32>
    %61 = arith.truncf %60 : vector<32x8xf32> to vector<32x8xbf16>
    %62 = vector.extract_strided_slice %57 {offsets = [32, 0], sizes = [32, 8], strides = [1, 1]} : vector<96x8xf32> to vector<32x8xf32>
    %63 = arith.truncf %62 : vector<32x8xf32> to vector<32x8xbf16>
    %64 = vector.extract_strided_slice %57 {offsets = [64, 0], sizes = [32, 8], strides = [1, 1]} : vector<96x8xf32> to vector<32x8xf32>
    %65 = arith.truncf %64 : vector<32x8xf32> to vector<32x8xbf16>
    %66 = vector.extract_strided_slice %61 {offsets = [0, 0], sizes = [8, 8], strides = [1, 1]} : vector<32x8xbf16> to vector<8x8xbf16>
    %67 = vector.extract_strided_slice %63 {offsets = [0, 0], sizes = [8, 8], strides = [1, 1]} : vector<32x8xbf16> to vector<8x8xbf16>
    %cst_24 = arith.constant dense<0.000000e+00> : vector<8x8xf32>
    %68 = tpu.matmul %66, %67, %cst_24 {dimension_numbers = #tpu.dot_dimension_numbers<[0], [0], [1], [1], [0, 1, 1, 1], [], []>} : vector<8x8xbf16>, vector<8x8xbf16>, vector<8x8xf32> -> vector<8x8xf32>
    %cst_25 = arith.constant dense<0xFF800000> : vector<8xf32>
    %69 = vector.multi_reduction <maximumf>, %68, %cst_25 [1] : vector<8x8xf32> to vector<8xf32>
    %70 = vector.shape_cast %69 : vector<8xf32> to vector<8x1xf32>
    %71 = vector.broadcast %70 : vector<8x1xf32> to vector<8x8xf32>
    %72 = arith.subf %68, %71 : vector<8x8xf32>
    %73 = math.exp %72 : vector<8x8xf32>
    %cst_26 = arith.constant dense<0.000000e+00> : vector<8xf32>
    %74 = vector.multi_reduction <add>, %73, %cst_26 [1] : vector<8x8xf32> to vector<8xf32>
    %75 = vector.shape_cast %74 : vector<8xf32> to vector<8x1xf32>
    %76 = tpu.reciprocal %75 {approx = true} : vector<8x1xf32> -> vector<8x1xf32>
    %77 = vector.broadcast %76 : vector<8x1xf32> to vector<8x8xf32>
    %78 = arith.mulf %73, %77 : vector<8x8xf32>
    %79 = vector.extract_strided_slice %65 {offsets = [0, 0], sizes = [8, 8], strides = [1, 1]} : vector<32x8xbf16> to vector<8x8xbf16>
    %80 = arith.truncf %78 : vector<8x8xf32> to vector<8x8xbf16>
    %cst_27 = arith.constant dense<0.000000e+00> : vector<8x8xf32>
    %81 = tpu.matmul %79, %80, %cst_27 {dimension_numbers = #tpu.dot_dimension_numbers<[1], [1], [0], [0], [0, 0, 1, 0], [], []>} : vector<8x8xbf16>, vector<8x8xbf16>, vector<8x8xf32> -> vector<8x8xf32>
    %82 = vector.extract_strided_slice %61 {offsets = [8, 0], sizes = [8, 8], strides = [1, 1]} : vector<32x8xbf16> to vector<8x8xbf16>
    %83 = vector.extract_strided_slice %63 {offsets = [8, 0], sizes = [8, 8], strides = [1, 1]} : vector<32x8xbf16> to vector<8x8xbf16>
    %cst_28 = arith.constant dense<0.000000e+00> : vector<8x8xf32>
    %84 = tpu.matmul %82, %83, %cst_28 {dimension_numbers = #tpu.dot_dimension_numbers<[0], [0], [1], [1], [0, 1, 1, 1], [], []>} : vector<8x8xbf16>, vector<8x8xbf16>, vector<8x8xf32> -> vector<8x8xf32>
    %cst_29 = arith.constant dense<0xFF800000> : vector<8xf32>
    %85 = vector.multi_reduction <maximumf>, %84, %cst_29 [1] : vector<8x8xf32> to vector<8xf32>
    %86 = vector.shape_cast %85 : vector<8xf32> to vector<8x1xf32>
    %87 = vector.broadcast %86 : vector<8x1xf32> to vector<8x8xf32>
    %88 = arith.subf %84, %87 : vector<8x8xf32>
    %89 = math.exp %88 : vector<8x8xf32>
    %cst_30 = arith.constant dense<0.000000e+00> : vector<8xf32>
    %90 = vector.multi_reduction <add>, %89, %cst_30 [1] : vector<8x8xf32> to vector<8xf32>
    %91 = vector.shape_cast %90 : vector<8xf32> to vector<8x1xf32>
    %92 = tpu.reciprocal %91 {approx = true} : vector<8x1xf32> -> vector<8x1xf32>
    %93 = vector.broadcast %92 : vector<8x1xf32> to vector<8x8xf32>
    %94 = arith.mulf %89, %93 : vector<8x8xf32>
    %95 = vector.extract_strided_slice %65 {offsets = [8, 0], sizes = [8, 8], strides = [1, 1]} : vector<32x8xbf16> to vector<8x8xbf16>
    %96 = arith.truncf %94 : vector<8x8xf32> to vector<8x8xbf16>
    %cst_31 = arith.constant dense<0.000000e+00> : vector<8x8xf32>
    %97 = tpu.matmul %95, %96, %cst_31 {dimension_numbers = #tpu.dot_dimension_numbers<[1], [1], [0], [0], [0, 0, 1, 0], [], []>} : vector<8x8xbf16>, vector<8x8xbf16>, vector<8x8xf32> -> vector<8x8xf32>
    %98 = vector.extract_strided_slice %61 {offsets = [16, 0], sizes = [8, 8], strides = [1, 1]} : vector<32x8xbf16> to vector<8x8xbf16>
    %99 = vector.extract_strided_slice %63 {offsets = [16, 0], sizes = [8, 8], strides = [1, 1]} : vector<32x8xbf16> to vector<8x8xbf16>
    %cst_32 = arith.constant dense<0.000000e+00> : vector<8x8xf32>
    %100 = tpu.matmul %98, %99, %cst_32 {dimension_numbers = #tpu.dot_dimension_numbers<[0], [0], [1], [1], [0, 1, 1, 1], [], []>} : vector<8x8xbf16>, vector<8x8xbf16>, vector<8x8xf32> -> vector<8x8xf32>
    %cst_33 = arith.constant dense<0xFF800000> : vector<8xf32>
    %101 = vector.multi_reduction <maximumf>, %100, %cst_33 [1] : vector<8x8xf32> to vector<8xf32>
    %102 = vector.shape_cast %101 : vector<8xf32> to vector<8x1xf32>
    %103 = vector.broadcast %102 : vector<8x1xf32> to vector<8x8xf32>
    %104 = arith.subf %100, %103 : vector<8x8xf32>
    %105 = math.exp %104 : vector<8x8xf32>
    %cst_34 = arith.constant dense<0.000000e+00> : vector<8xf32>
    %106 = vector.multi_reduction <add>, %105, %cst_34 [1] : vector<8x8xf32> to vector<8xf32>
    %107 = vector.shape_cast %106 : vector<8xf32> to vector<8x1xf32>
    %108 = tpu.reciprocal %107 {approx = true} : vector<8x1xf32> -> vector<8x1xf32>
    %109 = vector.broadcast %108 : vector<8x1xf32> to vector<8x8xf32>
    %110 = arith.mulf %105, %109 : vector<8x8xf32>
    %111 = vector.extract_strided_slice %65 {offsets = [16, 0], sizes = [8, 8], strides = [1, 1]} : vector<32x8xbf16> to vector<8x8xbf16>
    %112 = arith.truncf %110 : vector<8x8xf32> to vector<8x8xbf16>
    %cst_35 = arith.constant dense<0.000000e+00> : vector<8x8xf32>
    %113 = tpu.matmul %111, %112, %cst_35 {dimension_numbers = #tpu.dot_dimension_numbers<[1], [1], [0], [0], [0, 0, 1, 0], [], []>} : vector<8x8xbf16>, vector<8x8xbf16>, vector<8x8xf32> -> vector<8x8xf32>
    %114 = vector.extract_strided_slice %61 {offsets = [24, 0], sizes = [8, 8], strides = [1, 1]} : vector<32x8xbf16> to vector<8x8xbf16>
    %115 = vector.extract_strided_slice %63 {offsets = [24, 0], sizes = [8, 8], strides = [1, 1]} : vector<32x8xbf16> to vector<8x8xbf16>
    %cst_36 = arith.constant dense<0.000000e+00> : vector<8x8xf32>
    %116 = tpu.matmul %114, %115, %cst_36 {dimension_numbers = #tpu.dot_dimension_numbers<[0], [0], [1], [1], [0, 1, 1, 1], [], []>} : vector<8x8xbf16>, vector<8x8xbf16>, vector<8x8xf32> -> vector<8x8xf32>
    %cst_37 = arith.constant dense<0xFF800000> : vector<8xf32>
    %117 = vector.multi_reduction <maximumf>, %116, %cst_37 [1] : vector<8x8xf32> to vector<8xf32>
    %118 = vector.shape_cast %117 : vector<8xf32> to vector<8x1xf32>
    %119 = vector.broadcast %118 : vector<8x1xf32> to vector<8x8xf32>
    %120 = arith.subf %116, %119 : vector<8x8xf32>
    %121 = math.exp %120 : vector<8x8xf32>
    %cst_38 = arith.constant dense<0.000000e+00> : vector<8xf32>
    %122 = vector.multi_reduction <add>, %121, %cst_38 [1] : vector<8x8xf32> to vector<8xf32>
    %123 = vector.shape_cast %122 : vector<8xf32> to vector<8x1xf32>
    %124 = tpu.reciprocal %123 {approx = true} : vector<8x1xf32> -> vector<8x1xf32>
    %125 = vector.broadcast %124 : vector<8x1xf32> to vector<8x8xf32>
    %126 = arith.mulf %121, %125 : vector<8x8xf32>
    %127 = vector.extract_strided_slice %65 {offsets = [24, 0], sizes = [8, 8], strides = [1, 1]} : vector<32x8xbf16> to vector<8x8xbf16>
    %128 = arith.truncf %126 : vector<8x8xf32> to vector<8x8xbf16>
    %cst_39 = arith.constant dense<0.000000e+00> : vector<8x8xf32>
    %129 = tpu.matmul %127, %128, %cst_39 {dimension_numbers = #tpu.dot_dimension_numbers<[1], [1], [0], [0], [0, 0, 1, 0], [], []>} : vector<8x8xbf16>, vector<8x8xbf16>, vector<8x8xf32> -> vector<8x8xf32>
    %130 = tpu.concatenate %81, %97, %113, %129 in 0 : vector<8x8xf32>, vector<8x8xf32>, vector<8x8xf32>, vector<8x8xf32> -> vector<32x8xf32>
    %131 = arith.truncf %130 : vector<32x8xf32> to vector<32x8xbf16>
    %c0_40 = arith.constant 0 : index
    %c0_41 = arith.constant 0 : index
    %c0_42 = arith.constant 0 : index
    %132 = vector.load %arg8[%c0_40, %c0_41, %c0_42] : memref<2x32x32xbf16, #tpu.memory_space<vmem>>, vector<1x32x32xbf16>
    %133 = vector.shape_cast %132 : vector<1x32x32xbf16> to vector<32x32xbf16>
    %cst_43 = arith.constant dense<0.000000e+00> : vector<8x32xf32>
    %134 = tpu.matmul %131, %133, %cst_43 {dimension_numbers = #tpu.dot_dimension_numbers<[0], [0], [1], [1], [0, 1, 1, 1], [], []>} : vector<32x8xbf16>, vector<32x32xbf16>, vector<8x32xf32> -> vector<8x32xf32>
    %135 = arith.addf %17, %134 : vector<8x32xf32>
    %136 = vector.broadcast %24 : vector<1x32xf32> to vector<8x32xf32>
    %137 = arith.addf %135, %136 : vector<8x32xf32>
    %cst_44 = arith.constant dense<0.000000e+00> : vector<8xf32>
    %138 = vector.multi_reduction <add>, %137, %cst_44 [1] : vector<8x32xf32> to vector<8xf32>
    %139 = vector.shape_cast %138 : vector<8xf32> to vector<8x1xf32>
    %cst_45 = arith.constant 3.200000e+01 : f32
    %140 = vector.broadcast %cst_45 : f32 to vector<8x1xf32>
    %141 = arith.divf %139, %140 : vector<8x1xf32>
    %142 = arith.mulf %137, %137 : vector<8x32xf32>
    %cst_46 = arith.constant dense<0.000000e+00> : vector<8xf32>
    %143 = vector.multi_reduction <add>, %142, %cst_46 [1] : vector<8x32xf32> to vector<8xf32>
    %144 = vector.shape_cast %143 : vector<8xf32> to vector<8x1xf32>
    %cst_47 = arith.constant 3.200000e+01 : f32
    %145 = vector.broadcast %cst_47 : f32 to vector<8x1xf32>
    %146 = arith.divf %144, %145 : vector<8x1xf32>
    %147 = arith.mulf %141, %141 : vector<8x1xf32>
    %148 = arith.subf %146, %147 : vector<8x1xf32>
    %cst_48 = arith.constant 0.000000e+00 : f32
    %149 = vector.broadcast %cst_48 : f32 to vector<8x1xf32>
    %150 = arith.maximumf %148, %149 : vector<8x1xf32>
    %151 = vector.broadcast %141 : vector<8x1xf32> to vector<8x32xf32>
    %152 = arith.subf %137, %151 : vector<8x32xf32>
    %cst_49 = arith.constant 9.99999974E-6 : f32
    %153 = vector.broadcast %cst_49 : f32 to vector<8x1xf32>
    %154 = arith.addf %150, %153 : vector<8x1xf32>
    %155 = math.rsqrt %154 : vector<8x1xf32>
    %156 = vector.broadcast %155 : vector<8x1xf32> to vector<8x32xf32>
    %157 = arith.mulf %152, %156 : vector<8x32xf32>
    %158 = vector.broadcast %22 : vector<1x32xf32> to vector<8x32xf32>
    %159 = arith.mulf %157, %158 : vector<8x32xf32>
    %160 = vector.broadcast %23 : vector<1x32xf32> to vector<8x32xf32>
    %161 = arith.addf %159, %160 : vector<8x32xf32>
    %162 = arith.truncf %161 : vector<8x32xf32> to vector<8x32xbf16>
    %c0_50 = arith.constant 0 : index
    %c0_51 = arith.constant 0 : index
    %c0_52 = arith.constant 0 : index
    %163 = vector.load %arg9[%c0_50, %c0_51, %c0_52] : memref<2x32x128xbf16, #tpu.memory_space<vmem>>, vector<1x32x128xbf16>
    %164 = vector.shape_cast %163 : vector<1x32x128xbf16> to vector<32x128xbf16>
    %cst_53 = arith.constant dense<0.000000e+00> : vector<8x128xf32>
    %165 = tpu.matmul %162, %164, %cst_53 {dimension_numbers = #tpu.dot_dimension_numbers<[1], [0], [0], [1], [0, 0, 1, 1], [], []>} : vector<8x32xbf16>, vector<32x128xbf16>, vector<8x128xf32> -> vector<8x128xf32>
    %c0_54 = arith.constant 0 : index
    %c0_55 = arith.constant 0 : index
    %c0_56 = arith.constant 0 : index
    %166 = vector.load %arg6[%c0_54, %c0_55, %c0_56] : memref<2x1x128xf32, #tpu.memory_space<vmem>>, vector<1x1x128xf32>
    %167 = vector.shape_cast %166 : vector<1x1x128xf32> to vector<1x128xf32>
    %168 = vector.broadcast %167 : vector<1x128xf32> to vector<8x128xf32>
    %169 = arith.addf %165, %168 : vector<8x128xf32>
    %cst_57 = arith.constant 0.707106769 : f32
    %170 = vector.broadcast %cst_57 : f32 to vector<8x128xf32>
    %171 = arith.mulf %169, %170 : vector<8x128xf32>
    %172 = math.absf %171 : vector<8x128xf32>
    %cst_58 = arith.constant 0.327591091 : f32
    %173 = vector.broadcast %cst_58 : f32 to vector<8x128xf32>
    %174 = arith.mulf %173, %172 : vector<8x128xf32>
    %cst_59 = arith.constant 1.000000e+00 : f32
    %175 = vector.broadcast %cst_59 : f32 to vector<8x128xf32>
    %176 = arith.addf %175, %174 : vector<8x128xf32>
    %cst_60 = arith.constant 1.000000e+00 : f32
    %177 = vector.broadcast %cst_60 : f32 to vector<8x128xf32>
    %178 = arith.divf %177, %176 : vector<8x128xf32>
    %cst_61 = arith.constant 1.06140542 : f32
    %179 = vector.broadcast %cst_61 : f32 to vector<8x128xf32>
    %180 = arith.mulf %179, %178 : vector<8x128xf32>
    %cst_62 = arith.constant 1.45315206 : f32
    %181 = vector.broadcast %cst_62 : f32 to vector<8x128xf32>
    %182 = arith.subf %180, %181 : vector<8x128xf32>
    %183 = arith.mulf %182, %178 : vector<8x128xf32>
    %cst_63 = arith.constant 1.42141378 : f32
    %184 = vector.broadcast %cst_63 : f32 to vector<8x128xf32>
    %185 = arith.addf %183, %184 : vector<8x128xf32>
    %186 = arith.mulf %185, %178 : vector<8x128xf32>
    %cst_64 = arith.constant 0.284496725 : f32
    %187 = vector.broadcast %cst_64 : f32 to vector<8x128xf32>
    %188 = arith.subf %186, %187 : vector<8x128xf32>
    %189 = arith.mulf %188, %178 : vector<8x128xf32>
    %cst_65 = arith.constant 0.254829586 : f32
    %190 = vector.broadcast %cst_65 : f32 to vector<8x128xf32>
    %191 = arith.addf %189, %190 : vector<8x128xf32>
    %192 = arith.mulf %191, %178 : vector<8x128xf32>
    %cst_66 = arith.constant 0.000000e+00 : f32
    %193 = vector.broadcast %cst_66 : f32 to vector<8x128xf32>
    %194 = arith.subf %193, %172 : vector<8x128xf32>
    %195 = arith.mulf %194, %172 : vector<8x128xf32>
    %196 = math.exp %195 : vector<8x128xf32>
    %197 = arith.mulf %192, %196 : vector<8x128xf32>
    %cst_67 = arith.constant 1.000000e+00 : f32
    %198 = vector.broadcast %cst_67 : f32 to vector<8x128xf32>
    %199 = arith.subf %198, %197 : vector<8x128xf32>
    %cst_68 = arith.constant 0.000000e+00 : f32
    %200 = vector.broadcast %cst_68 : f32 to vector<8x128xf32>
    %201 = arith.cmpf oge, %171, %200 : vector<8x128xf32>
    %cst_69 = arith.constant 0.000000e+00 : f32
    %202 = vector.broadcast %cst_69 : f32 to vector<8x128xf32>
    %203 = arith.subf %202, %199 : vector<8x128xf32>
    %204 = arith.select %201, %199, %203 : vector<8x128xi1>, vector<8x128xf32>
    %cst_70 = arith.constant 5.000000e-01 : f32
    %205 = vector.broadcast %cst_70 : f32 to vector<8x128xf32>
    %206 = arith.mulf %205, %169 : vector<8x128xf32>
    %cst_71 = arith.constant 1.000000e+00 : f32
    %207 = vector.broadcast %cst_71 : f32 to vector<8x128xf32>
    %208 = arith.addf %207, %204 : vector<8x128xf32>
    %209 = arith.mulf %206, %208 : vector<8x128xf32>
    %210 = arith.truncf %209 : vector<8x128xf32> to vector<8x128xbf16>
    %c0_72 = arith.constant 0 : index
    %c0_73 = arith.constant 0 : index
    %c0_74 = arith.constant 0 : index
    %211 = vector.load %arg10[%c0_72, %c0_73, %c0_74] : memref<2x128x32xbf16, #tpu.memory_space<vmem>>, vector<1x128x32xbf16>
    %212 = vector.shape_cast %211 : vector<1x128x32xbf16> to vector<128x32xbf16>
    %cst_75 = arith.constant dense<0.000000e+00> : vector<8x32xf32>
    %213 = tpu.matmul %210, %212, %cst_75 {dimension_numbers = #tpu.dot_dimension_numbers<[1], [0], [0], [1], [0, 0, 1, 1], [], []>} : vector<8x128xbf16>, vector<128x32xbf16>, vector<8x32xf32> -> vector<8x32xf32>
    %214 = arith.addf %137, %213 : vector<8x32xf32>
    %215 = vector.broadcast %25 : vector<1x32xf32> to vector<8x32xf32>
    %216 = arith.addf %214, %215 : vector<8x32xf32>
    %217 = vector.extract_strided_slice %0 {offsets = [1, 0, 0], sizes = [1, 8, 32], strides = [1, 1, 1]} : vector<2x8x32xf32> to vector<1x8x32xf32>
    %218 = vector.shape_cast %217 : vector<1x8x32xf32> to vector<8x32xf32>
    %219 = vector.extract_strided_slice %218 {offsets = [0, 0], sizes = [1, 32], strides = [1, 1]} : vector<8x32xf32> to vector<1x32xf32>
    %220 = vector.extract_strided_slice %218 {offsets = [1, 0], sizes = [1, 32], strides = [1, 1]} : vector<8x32xf32> to vector<1x32xf32>
    %221 = vector.extract_strided_slice %218 {offsets = [2, 0], sizes = [1, 32], strides = [1, 1]} : vector<8x32xf32> to vector<1x32xf32>
    %222 = vector.extract_strided_slice %218 {offsets = [3, 0], sizes = [1, 32], strides = [1, 1]} : vector<8x32xf32> to vector<1x32xf32>
    %223 = vector.extract_strided_slice %218 {offsets = [4, 0], sizes = [1, 32], strides = [1, 1]} : vector<8x32xf32> to vector<1x32xf32>
    %224 = vector.extract_strided_slice %218 {offsets = [5, 0], sizes = [1, 32], strides = [1, 1]} : vector<8x32xf32> to vector<1x32xf32>
    %cst_76 = arith.constant dense<0.000000e+00> : vector<8xf32>
    %225 = vector.multi_reduction <add>, %216, %cst_76 [1] : vector<8x32xf32> to vector<8xf32>
    %226 = vector.shape_cast %225 : vector<8xf32> to vector<8x1xf32>
    %cst_77 = arith.constant 3.200000e+01 : f32
    %227 = vector.broadcast %cst_77 : f32 to vector<8x1xf32>
    %228 = arith.divf %226, %227 : vector<8x1xf32>
    %229 = arith.mulf %216, %216 : vector<8x32xf32>
    %cst_78 = arith.constant dense<0.000000e+00> : vector<8xf32>
    %230 = vector.multi_reduction <add>, %229, %cst_78 [1] : vector<8x32xf32> to vector<8xf32>
    %231 = vector.shape_cast %230 : vector<8xf32> to vector<8x1xf32>
    %cst_79 = arith.constant 3.200000e+01 : f32
    %232 = vector.broadcast %cst_79 : f32 to vector<8x1xf32>
    %233 = arith.divf %231, %232 : vector<8x1xf32>
    %234 = arith.mulf %228, %228 : vector<8x1xf32>
    %235 = arith.subf %233, %234 : vector<8x1xf32>
    %cst_80 = arith.constant 0.000000e+00 : f32
    %236 = vector.broadcast %cst_80 : f32 to vector<8x1xf32>
    %237 = arith.maximumf %235, %236 : vector<8x1xf32>
    %238 = vector.broadcast %228 : vector<8x1xf32> to vector<8x32xf32>
    %239 = arith.subf %216, %238 : vector<8x32xf32>
    %cst_81 = arith.constant 9.99999974E-6 : f32
    %240 = vector.broadcast %cst_81 : f32 to vector<8x1xf32>
    %241 = arith.addf %237, %240 : vector<8x1xf32>
    %242 = math.rsqrt %241 : vector<8x1xf32>
    %243 = vector.broadcast %242 : vector<8x1xf32> to vector<8x32xf32>
    %244 = arith.mulf %239, %243 : vector<8x32xf32>
    %245 = vector.broadcast %219 : vector<1x32xf32> to vector<8x32xf32>
    %246 = arith.mulf %244, %245 : vector<8x32xf32>
    %247 = vector.broadcast %220 : vector<1x32xf32> to vector<8x32xf32>
    %248 = arith.addf %246, %247 : vector<8x32xf32>
    %249 = arith.truncf %248 : vector<8x32xf32> to vector<8x32xbf16>
    %c1 = arith.constant 1 : index
    %c0_82 = arith.constant 0 : index
    %c0_83 = arith.constant 0 : index
    %250 = vector.load %arg7[%c1, %c0_82, %c0_83] : memref<2x96x32xbf16, #tpu.memory_space<vmem>>, vector<1x96x32xbf16>
    %251 = vector.shape_cast %250 : vector<1x96x32xbf16> to vector<96x32xbf16>
    %cst_84 = arith.constant dense<0.000000e+00> : vector<96x8xf32>
    %252 = tpu.matmul %251, %249, %cst_84 {dimension_numbers = #tpu.dot_dimension_numbers<[1], [1], [0], [0], [0, 0, 1, 0], [], []>} : vector<96x32xbf16>, vector<8x32xbf16>, vector<96x8xf32> -> vector<96x8xf32>
    %c1_85 = arith.constant 1 : index
    %c0_86 = arith.constant 0 : index
    %c0_87 = arith.constant 0 : index
    %253 = vector.load %arg5[%c1_85, %c0_86, %c0_87] : memref<2x96x1xf32, #tpu.memory_space<vmem>>, vector<1x96x1xf32>
    %254 = vector.shape_cast %253 : vector<1x96x1xf32> to vector<96x1xf32>
    %255 = vector.broadcast %254 : vector<96x1xf32> to vector<96x8xf32>
    %256 = arith.addf %252, %255 : vector<96x8xf32>
    %257 = vector.extract_strided_slice %256 {offsets = [0, 0], sizes = [32, 8], strides = [1, 1]} : vector<96x8xf32> to vector<32x8xf32>
    %cst_88 = arith.constant 0.353553385 : f32
    %258 = vector.broadcast %cst_88 : f32 to vector<32x8xf32>
    %259 = arith.mulf %257, %258 : vector<32x8xf32>
    %260 = arith.truncf %259 : vector<32x8xf32> to vector<32x8xbf16>
    %261 = vector.extract_strided_slice %256 {offsets = [32, 0], sizes = [32, 8], strides = [1, 1]} : vector<96x8xf32> to vector<32x8xf32>
    %262 = arith.truncf %261 : vector<32x8xf32> to vector<32x8xbf16>
    %263 = vector.extract_strided_slice %256 {offsets = [64, 0], sizes = [32, 8], strides = [1, 1]} : vector<96x8xf32> to vector<32x8xf32>
    %264 = arith.truncf %263 : vector<32x8xf32> to vector<32x8xbf16>
    %265 = vector.extract_strided_slice %260 {offsets = [0, 0], sizes = [8, 8], strides = [1, 1]} : vector<32x8xbf16> to vector<8x8xbf16>
    %266 = vector.extract_strided_slice %262 {offsets = [0, 0], sizes = [8, 8], strides = [1, 1]} : vector<32x8xbf16> to vector<8x8xbf16>
    %cst_89 = arith.constant dense<0.000000e+00> : vector<8x8xf32>
    %267 = tpu.matmul %265, %266, %cst_89 {dimension_numbers = #tpu.dot_dimension_numbers<[0], [0], [1], [1], [0, 1, 1, 1], [], []>} : vector<8x8xbf16>, vector<8x8xbf16>, vector<8x8xf32> -> vector<8x8xf32>
    %cst_90 = arith.constant dense<0xFF800000> : vector<8xf32>
    %268 = vector.multi_reduction <maximumf>, %267, %cst_90 [1] : vector<8x8xf32> to vector<8xf32>
    %269 = vector.shape_cast %268 : vector<8xf32> to vector<8x1xf32>
    %270 = vector.broadcast %269 : vector<8x1xf32> to vector<8x8xf32>
    %271 = arith.subf %267, %270 : vector<8x8xf32>
    %272 = math.exp %271 : vector<8x8xf32>
    %cst_91 = arith.constant dense<0.000000e+00> : vector<8xf32>
    %273 = vector.multi_reduction <add>, %272, %cst_91 [1] : vector<8x8xf32> to vector<8xf32>
    %274 = vector.shape_cast %273 : vector<8xf32> to vector<8x1xf32>
    %275 = tpu.reciprocal %274 {approx = true} : vector<8x1xf32> -> vector<8x1xf32>
    %276 = vector.broadcast %275 : vector<8x1xf32> to vector<8x8xf32>
    %277 = arith.mulf %272, %276 : vector<8x8xf32>
    %278 = vector.extract_strided_slice %264 {offsets = [0, 0], sizes = [8, 8], strides = [1, 1]} : vector<32x8xbf16> to vector<8x8xbf16>
    %279 = arith.truncf %277 : vector<8x8xf32> to vector<8x8xbf16>
    %cst_92 = arith.constant dense<0.000000e+00> : vector<8x8xf32>
    %280 = tpu.matmul %278, %279, %cst_92 {dimension_numbers = #tpu.dot_dimension_numbers<[1], [1], [0], [0], [0, 0, 1, 0], [], []>} : vector<8x8xbf16>, vector<8x8xbf16>, vector<8x8xf32> -> vector<8x8xf32>
    %281 = vector.extract_strided_slice %260 {offsets = [8, 0], sizes = [8, 8], strides = [1, 1]} : vector<32x8xbf16> to vector<8x8xbf16>
    %282 = vector.extract_strided_slice %262 {offsets = [8, 0], sizes = [8, 8], strides = [1, 1]} : vector<32x8xbf16> to vector<8x8xbf16>
    %cst_93 = arith.constant dense<0.000000e+00> : vector<8x8xf32>
    %283 = tpu.matmul %281, %282, %cst_93 {dimension_numbers = #tpu.dot_dimension_numbers<[0], [0], [1], [1], [0, 1, 1, 1], [], []>} : vector<8x8xbf16>, vector<8x8xbf16>, vector<8x8xf32> -> vector<8x8xf32>
    %cst_94 = arith.constant dense<0xFF800000> : vector<8xf32>
    %284 = vector.multi_reduction <maximumf>, %283, %cst_94 [1] : vector<8x8xf32> to vector<8xf32>
    %285 = vector.shape_cast %284 : vector<8xf32> to vector<8x1xf32>
    %286 = vector.broadcast %285 : vector<8x1xf32> to vector<8x8xf32>
    %287 = arith.subf %283, %286 : vector<8x8xf32>
    %288 = math.exp %287 : vector<8x8xf32>
    %cst_95 = arith.constant dense<0.000000e+00> : vector<8xf32>
    %289 = vector.multi_reduction <add>, %288, %cst_95 [1] : vector<8x8xf32> to vector<8xf32>
    %290 = vector.shape_cast %289 : vector<8xf32> to vector<8x1xf32>
    %291 = tpu.reciprocal %290 {approx = true} : vector<8x1xf32> -> vector<8x1xf32>
    %292 = vector.broadcast %291 : vector<8x1xf32> to vector<8x8xf32>
    %293 = arith.mulf %288, %292 : vector<8x8xf32>
    %294 = vector.extract_strided_slice %264 {offsets = [8, 0], sizes = [8, 8], strides = [1, 1]} : vector<32x8xbf16> to vector<8x8xbf16>
    %295 = arith.truncf %293 : vector<8x8xf32> to vector<8x8xbf16>
    %cst_96 = arith.constant dense<0.000000e+00> : vector<8x8xf32>
    %296 = tpu.matmul %294, %295, %cst_96 {dimension_numbers = #tpu.dot_dimension_numbers<[1], [1], [0], [0], [0, 0, 1, 0], [], []>} : vector<8x8xbf16>, vector<8x8xbf16>, vector<8x8xf32> -> vector<8x8xf32>
    %297 = vector.extract_strided_slice %260 {offsets = [16, 0], sizes = [8, 8], strides = [1, 1]} : vector<32x8xbf16> to vector<8x8xbf16>
    %298 = vector.extract_strided_slice %262 {offsets = [16, 0], sizes = [8, 8], strides = [1, 1]} : vector<32x8xbf16> to vector<8x8xbf16>
    %cst_97 = arith.constant dense<0.000000e+00> : vector<8x8xf32>
    %299 = tpu.matmul %297, %298, %cst_97 {dimension_numbers = #tpu.dot_dimension_numbers<[0], [0], [1], [1], [0, 1, 1, 1], [], []>} : vector<8x8xbf16>, vector<8x8xbf16>, vector<8x8xf32> -> vector<8x8xf32>
    %cst_98 = arith.constant dense<0xFF800000> : vector<8xf32>
    %300 = vector.multi_reduction <maximumf>, %299, %cst_98 [1] : vector<8x8xf32> to vector<8xf32>
    %301 = vector.shape_cast %300 : vector<8xf32> to vector<8x1xf32>
    %302 = vector.broadcast %301 : vector<8x1xf32> to vector<8x8xf32>
    %303 = arith.subf %299, %302 : vector<8x8xf32>
    %304 = math.exp %303 : vector<8x8xf32>
    %cst_99 = arith.constant dense<0.000000e+00> : vector<8xf32>
    %305 = vector.multi_reduction <add>, %304, %cst_99 [1] : vector<8x8xf32> to vector<8xf32>
    %306 = vector.shape_cast %305 : vector<8xf32> to vector<8x1xf32>
    %307 = tpu.reciprocal %306 {approx = true} : vector<8x1xf32> -> vector<8x1xf32>
    %308 = vector.broadcast %307 : vector<8x1xf32> to vector<8x8xf32>
    %309 = arith.mulf %304, %308 : vector<8x8xf32>
    %310 = vector.extract_strided_slice %264 {offsets = [16, 0], sizes = [8, 8], strides = [1, 1]} : vector<32x8xbf16> to vector<8x8xbf16>
    %311 = arith.truncf %309 : vector<8x8xf32> to vector<8x8xbf16>
    %cst_100 = arith.constant dense<0.000000e+00> : vector<8x8xf32>
    %312 = tpu.matmul %310, %311, %cst_100 {dimension_numbers = #tpu.dot_dimension_numbers<[1], [1], [0], [0], [0, 0, 1, 0], [], []>} : vector<8x8xbf16>, vector<8x8xbf16>, vector<8x8xf32> -> vector<8x8xf32>
    %313 = vector.extract_strided_slice %260 {offsets = [24, 0], sizes = [8, 8], strides = [1, 1]} : vector<32x8xbf16> to vector<8x8xbf16>
    %314 = vector.extract_strided_slice %262 {offsets = [24, 0], sizes = [8, 8], strides = [1, 1]} : vector<32x8xbf16> to vector<8x8xbf16>
    %cst_101 = arith.constant dense<0.000000e+00> : vector<8x8xf32>
    %315 = tpu.matmul %313, %314, %cst_101 {dimension_numbers = #tpu.dot_dimension_numbers<[0], [0], [1], [1], [0, 1, 1, 1], [], []>} : vector<8x8xbf16>, vector<8x8xbf16>, vector<8x8xf32> -> vector<8x8xf32>
    %cst_102 = arith.constant dense<0xFF800000> : vector<8xf32>
    %316 = vector.multi_reduction <maximumf>, %315, %cst_102 [1] : vector<8x8xf32> to vector<8xf32>
    %317 = vector.shape_cast %316 : vector<8xf32> to vector<8x1xf32>
    %318 = vector.broadcast %317 : vector<8x1xf32> to vector<8x8xf32>
    %319 = arith.subf %315, %318 : vector<8x8xf32>
    %320 = math.exp %319 : vector<8x8xf32>
    %cst_103 = arith.constant dense<0.000000e+00> : vector<8xf32>
    %321 = vector.multi_reduction <add>, %320, %cst_103 [1] : vector<8x8xf32> to vector<8xf32>
    %322 = vector.shape_cast %321 : vector<8xf32> to vector<8x1xf32>
    %323 = tpu.reciprocal %322 {approx = true} : vector<8x1xf32> -> vector<8x1xf32>
    %324 = vector.broadcast %323 : vector<8x1xf32> to vector<8x8xf32>
    %325 = arith.mulf %320, %324 : vector<8x8xf32>
    %326 = vector.extract_strided_slice %264 {offsets = [24, 0], sizes = [8, 8], strides = [1, 1]} : vector<32x8xbf16> to vector<8x8xbf16>
    %327 = arith.truncf %325 : vector<8x8xf32> to vector<8x8xbf16>
    %cst_104 = arith.constant dense<0.000000e+00> : vector<8x8xf32>
    %328 = tpu.matmul %326, %327, %cst_104 {dimension_numbers = #tpu.dot_dimension_numbers<[1], [1], [0], [0], [0, 0, 1, 0], [], []>} : vector<8x8xbf16>, vector<8x8xbf16>, vector<8x8xf32> -> vector<8x8xf32>
    %329 = tpu.concatenate %280, %296, %312, %328 in 0 : vector<8x8xf32>, vector<8x8xf32>, vector<8x8xf32>, vector<8x8xf32> -> vector<32x8xf32>
    %330 = arith.truncf %329 : vector<32x8xf32> to vector<32x8xbf16>
    %c1_105 = arith.constant 1 : index
    %c0_106 = arith.constant 0 : index
    %c0_107 = arith.constant 0 : index
    %331 = vector.load %arg8[%c1_105, %c0_106, %c0_107] : memref<2x32x32xbf16, #tpu.memory_space<vmem>>, vector<1x32x32xbf16>
    %332 = vector.shape_cast %331 : vector<1x32x32xbf16> to vector<32x32xbf16>
    %cst_108 = arith.constant dense<0.000000e+00> : vector<8x32xf32>
    %333 = tpu.matmul %330, %332, %cst_108 {dimension_numbers = #tpu.dot_dimension_numbers<[0], [0], [1], [1], [0, 1, 1, 1], [], []>} : vector<32x8xbf16>, vector<32x32xbf16>, vector<8x32xf32> -> vector<8x32xf32>
    %334 = arith.addf %216, %333 : vector<8x32xf32>
    %335 = vector.broadcast %223 : vector<1x32xf32> to vector<8x32xf32>
    %336 = arith.addf %334, %335 : vector<8x32xf32>
    %cst_109 = arith.constant dense<0.000000e+00> : vector<8xf32>
    %337 = vector.multi_reduction <add>, %336, %cst_109 [1] : vector<8x32xf32> to vector<8xf32>
    %338 = vector.shape_cast %337 : vector<8xf32> to vector<8x1xf32>
    %cst_110 = arith.constant 3.200000e+01 : f32
    %339 = vector.broadcast %cst_110 : f32 to vector<8x1xf32>
    %340 = arith.divf %338, %339 : vector<8x1xf32>
    %341 = arith.mulf %336, %336 : vector<8x32xf32>
    %cst_111 = arith.constant dense<0.000000e+00> : vector<8xf32>
    %342 = vector.multi_reduction <add>, %341, %cst_111 [1] : vector<8x32xf32> to vector<8xf32>
    %343 = vector.shape_cast %342 : vector<8xf32> to vector<8x1xf32>
    %cst_112 = arith.constant 3.200000e+01 : f32
    %344 = vector.broadcast %cst_112 : f32 to vector<8x1xf32>
    %345 = arith.divf %343, %344 : vector<8x1xf32>
    %346 = arith.mulf %340, %340 : vector<8x1xf32>
    %347 = arith.subf %345, %346 : vector<8x1xf32>
    %cst_113 = arith.constant 0.000000e+00 : f32
    %348 = vector.broadcast %cst_113 : f32 to vector<8x1xf32>
    %349 = arith.maximumf %347, %348 : vector<8x1xf32>
    %350 = vector.broadcast %340 : vector<8x1xf32> to vector<8x32xf32>
    %351 = arith.subf %336, %350 : vector<8x32xf32>
    %cst_114 = arith.constant 9.99999974E-6 : f32
    %352 = vector.broadcast %cst_114 : f32 to vector<8x1xf32>
    %353 = arith.addf %349, %352 : vector<8x1xf32>
    %354 = math.rsqrt %353 : vector<8x1xf32>
    %355 = vector.broadcast %354 : vector<8x1xf32> to vector<8x32xf32>
    %356 = arith.mulf %351, %355 : vector<8x32xf32>
    %357 = vector.broadcast %221 : vector<1x32xf32> to vector<8x32xf32>
    %358 = arith.mulf %356, %357 : vector<8x32xf32>
    %359 = vector.broadcast %222 : vector<1x32xf32> to vector<8x32xf32>
    %360 = arith.addf %358, %359 : vector<8x32xf32>
    %361 = arith.truncf %360 : vector<8x32xf32> to vector<8x32xbf16>
    %c1_115 = arith.constant 1 : index
    %c0_116 = arith.constant 0 : index
    %c0_117 = arith.constant 0 : index
    %362 = vector.load %arg9[%c1_115, %c0_116, %c0_117] : memref<2x32x128xbf16, #tpu.memory_space<vmem>>, vector<1x32x128xbf16>
    %363 = vector.shape_cast %362 : vector<1x32x128xbf16> to vector<32x128xbf16>
    %cst_118 = arith.constant dense<0.000000e+00> : vector<8x128xf32>
    %364 = tpu.matmul %361, %363, %cst_118 {dimension_numbers = #tpu.dot_dimension_numbers<[1], [0], [0], [1], [0, 0, 1, 1], [], []>} : vector<8x32xbf16>, vector<32x128xbf16>, vector<8x128xf32> -> vector<8x128xf32>
    %c1_119 = arith.constant 1 : index
    %c0_120 = arith.constant 0 : index
    %c0_121 = arith.constant 0 : index
    %365 = vector.load %arg6[%c1_119, %c0_120, %c0_121] : memref<2x1x128xf32, #tpu.memory_space<vmem>>, vector<1x1x128xf32>
    %366 = vector.shape_cast %365 : vector<1x1x128xf32> to vector<1x128xf32>
    %367 = vector.broadcast %366 : vector<1x128xf32> to vector<8x128xf32>
    %368 = arith.addf %364, %367 : vector<8x128xf32>
    %cst_122 = arith.constant 0.707106769 : f32
    %369 = vector.broadcast %cst_122 : f32 to vector<8x128xf32>
    %370 = arith.mulf %368, %369 : vector<8x128xf32>
    %371 = math.absf %370 : vector<8x128xf32>
    %cst_123 = arith.constant 0.327591091 : f32
    %372 = vector.broadcast %cst_123 : f32 to vector<8x128xf32>
    %373 = arith.mulf %372, %371 : vector<8x128xf32>
    %cst_124 = arith.constant 1.000000e+00 : f32
    %374 = vector.broadcast %cst_124 : f32 to vector<8x128xf32>
    %375 = arith.addf %374, %373 : vector<8x128xf32>
    %cst_125 = arith.constant 1.000000e+00 : f32
    %376 = vector.broadcast %cst_125 : f32 to vector<8x128xf32>
    %377 = arith.divf %376, %375 : vector<8x128xf32>
    %cst_126 = arith.constant 1.06140542 : f32
    %378 = vector.broadcast %cst_126 : f32 to vector<8x128xf32>
    %379 = arith.mulf %378, %377 : vector<8x128xf32>
    %cst_127 = arith.constant 1.45315206 : f32
    %380 = vector.broadcast %cst_127 : f32 to vector<8x128xf32>
    %381 = arith.subf %379, %380 : vector<8x128xf32>
    %382 = arith.mulf %381, %377 : vector<8x128xf32>
    %cst_128 = arith.constant 1.42141378 : f32
    %383 = vector.broadcast %cst_128 : f32 to vector<8x128xf32>
    %384 = arith.addf %382, %383 : vector<8x128xf32>
    %385 = arith.mulf %384, %377 : vector<8x128xf32>
    %cst_129 = arith.constant 0.284496725 : f32
    %386 = vector.broadcast %cst_129 : f32 to vector<8x128xf32>
    %387 = arith.subf %385, %386 : vector<8x128xf32>
    %388 = arith.mulf %387, %377 : vector<8x128xf32>
    %cst_130 = arith.constant 0.254829586 : f32
    %389 = vector.broadcast %cst_130 : f32 to vector<8x128xf32>
    %390 = arith.addf %388, %389 : vector<8x128xf32>
    %391 = arith.mulf %390, %377 : vector<8x128xf32>
    %cst_131 = arith.constant 0.000000e+00 : f32
    %392 = vector.broadcast %cst_131 : f32 to vector<8x128xf32>
    %393 = arith.subf %392, %371 : vector<8x128xf32>
    %394 = arith.mulf %393, %371 : vector<8x128xf32>
    %395 = math.exp %394 : vector<8x128xf32>
    %396 = arith.mulf %391, %395 : vector<8x128xf32>
    %cst_132 = arith.constant 1.000000e+00 : f32
    %397 = vector.broadcast %cst_132 : f32 to vector<8x128xf32>
    %398 = arith.subf %397, %396 : vector<8x128xf32>
    %cst_133 = arith.constant 0.000000e+00 : f32
    %399 = vector.broadcast %cst_133 : f32 to vector<8x128xf32>
    %400 = arith.cmpf oge, %370, %399 : vector<8x128xf32>
    %cst_134 = arith.constant 0.000000e+00 : f32
    %401 = vector.broadcast %cst_134 : f32 to vector<8x128xf32>
    %402 = arith.subf %401, %398 : vector<8x128xf32>
    %403 = arith.select %400, %398, %402 : vector<8x128xi1>, vector<8x128xf32>
    %cst_135 = arith.constant 5.000000e-01 : f32
    %404 = vector.broadcast %cst_135 : f32 to vector<8x128xf32>
    %405 = arith.mulf %404, %368 : vector<8x128xf32>
    %cst_136 = arith.constant 1.000000e+00 : f32
    %406 = vector.broadcast %cst_136 : f32 to vector<8x128xf32>
    %407 = arith.addf %406, %403 : vector<8x128xf32>
    %408 = arith.mulf %405, %407 : vector<8x128xf32>
    %409 = arith.truncf %408 : vector<8x128xf32> to vector<8x128xbf16>
    %c1_137 = arith.constant 1 : index
    %c0_138 = arith.constant 0 : index
    %c0_139 = arith.constant 0 : index
    %410 = vector.load %arg10[%c1_137, %c0_138, %c0_139] : memref<2x128x32xbf16, #tpu.memory_space<vmem>>, vector<1x128x32xbf16>
    %411 = vector.shape_cast %410 : vector<1x128x32xbf16> to vector<128x32xbf16>
    %cst_140 = arith.constant dense<0.000000e+00> : vector<8x32xf32>
    %412 = tpu.matmul %409, %411, %cst_140 {dimension_numbers = #tpu.dot_dimension_numbers<[1], [0], [0], [1], [0, 0, 1, 1], [], []>} : vector<8x128xbf16>, vector<128x32xbf16>, vector<8x32xf32> -> vector<8x32xf32>
    %413 = arith.addf %336, %412 : vector<8x32xf32>
    %414 = vector.broadcast %224 : vector<1x32xf32> to vector<8x32xf32>
    %415 = arith.addf %413, %414 : vector<8x32xf32>
    %416 = vector.extract_strided_slice %0 {offsets = [0, 6, 0], sizes = [1, 1, 32], strides = [1, 1, 1]} : vector<2x8x32xf32> to vector<1x1x32xf32>
    %417 = vector.shape_cast %416 : vector<1x1x32xf32> to vector<1x32xf32>
    %418 = vector.extract_strided_slice %0 {offsets = [0, 7, 0], sizes = [1, 1, 32], strides = [1, 1, 1]} : vector<2x8x32xf32> to vector<1x1x32xf32>
    %419 = vector.shape_cast %418 : vector<1x1x32xf32> to vector<1x32xf32>
    %cst_141 = arith.constant dense<0.000000e+00> : vector<8xf32>
    %420 = vector.multi_reduction <add>, %415, %cst_141 [1] : vector<8x32xf32> to vector<8xf32>
    %421 = vector.shape_cast %420 : vector<8xf32> to vector<8x1xf32>
    %cst_142 = arith.constant 3.200000e+01 : f32
    %422 = vector.broadcast %cst_142 : f32 to vector<8x1xf32>
    %423 = arith.divf %421, %422 : vector<8x1xf32>
    %424 = arith.mulf %415, %415 : vector<8x32xf32>
    %cst_143 = arith.constant dense<0.000000e+00> : vector<8xf32>
    %425 = vector.multi_reduction <add>, %424, %cst_143 [1] : vector<8x32xf32> to vector<8xf32>
    %426 = vector.shape_cast %425 : vector<8xf32> to vector<8x1xf32>
    %cst_144 = arith.constant 3.200000e+01 : f32
    %427 = vector.broadcast %cst_144 : f32 to vector<8x1xf32>
    %428 = arith.divf %426, %427 : vector<8x1xf32>
    %429 = arith.mulf %423, %423 : vector<8x1xf32>
    %430 = arith.subf %428, %429 : vector<8x1xf32>
    %cst_145 = arith.constant 0.000000e+00 : f32
    %431 = vector.broadcast %cst_145 : f32 to vector<8x1xf32>
    %432 = arith.maximumf %430, %431 : vector<8x1xf32>
    %433 = vector.broadcast %423 : vector<8x1xf32> to vector<8x32xf32>
    %434 = arith.subf %415, %433 : vector<8x32xf32>
    %cst_146 = arith.constant 9.99999974E-6 : f32
    %435 = vector.broadcast %cst_146 : f32 to vector<8x1xf32>
    %436 = arith.addf %432, %435 : vector<8x1xf32>
    %437 = math.rsqrt %436 : vector<8x1xf32>
    %438 = vector.broadcast %437 : vector<8x1xf32> to vector<8x32xf32>
    %439 = arith.mulf %434, %438 : vector<8x32xf32>
    %440 = vector.broadcast %417 : vector<1x32xf32> to vector<8x32xf32>
    %441 = arith.mulf %439, %440 : vector<8x32xf32>
    %442 = vector.broadcast %419 : vector<1x32xf32> to vector<8x32xf32>
    %443 = arith.addf %441, %442 : vector<8x32xf32>
    %444 = arith.truncf %443 : vector<8x32xf32> to vector<8x32xbf16>
    %c0_147 = arith.constant 0 : index
    %c0_148 = arith.constant 0 : index
    %445 = vector.load %arg11[%c0_147, %c0_148] : memref<32x128xbf16, #tpu.memory_space<vmem>>, vector<32x128xbf16>
    %cst_149 = arith.constant dense<0.000000e+00> : vector<8x128xf32>
    %446 = tpu.matmul %444, %445, %cst_149 {dimension_numbers = #tpu.dot_dimension_numbers<[1], [0], [0], [1], [0, 0, 1, 1], [], []>} : vector<8x32xbf16>, vector<32x128xbf16>, vector<8x128xf32> -> vector<8x128xf32>
    %c0_150 = arith.constant 0 : index
    %c0_151 = arith.constant 0 : index
    %447 = vector.load %arg12[%c0_150, %c0_151] : memref<8x128xf32, #tpu.memory_space<vmem>>, vector<8x128xf32>
    tpu.vector_store %arg12[%c0_150, %c0_151], %446 {strides = array<i32>} : memref<8x128xf32, #tpu.memory_space<vmem>>, vector<8x128xf32>,
    return
  }
  func.func @transform_0(%arg0: i32) -> (i32, i32) {
    %c0_i32 = arith.constant 0 : i32
    %c0_i32_0 = arith.constant 0 : i32
    return %arg0, %c0_i32 : i32, i32
  }
  func.func @transform_1(%arg0: i32) -> (i32, i32) {
    %c0_i32 = arith.constant 0 : i32
    %c0_i32_0 = arith.constant 0 : i32
    %c0_i32_1 = arith.constant 0 : i32
    return %c0_i32, %c0_i32_0 : i32, i32
  }
  func.func @transform_2(%arg0: i32) -> (i32, i32) {
    %c0_i32 = arith.constant 0 : i32
    %c0_i32_0 = arith.constant 0 : i32
    %c0_i32_1 = arith.constant 0 : i32
    return %c0_i32, %c0_i32_0 : i32, i32
  }
  func.func @transform_3(%arg0: i32) -> (i32, i32, i32) {
    %c0_i32 = arith.constant 0 : i32
    %c0_i32_0 = arith.constant 0 : i32
    %c0_i32_1 = arith.constant 0 : i32
    %c0_i32_2 = arith.constant 0 : i32
    return %c0_i32, %c0_i32_0, %c0_i32_1 : i32, i32, i32
  }
  func.func @transform_4(%arg0: i32) -> (i32, i32, i32) {
    %c0_i32 = arith.constant 0 : i32
    %c0_i32_0 = arith.constant 0 : i32
    %c0_i32_1 = arith.constant 0 : i32
    %c0_i32_2 = arith.constant 0 : i32
    return %c0_i32, %c0_i32_0, %c0_i32_1 : i32, i32, i32
  }
  func.func @transform_5(%arg0: i32) -> (i32, i32, i32) {
    %c0_i32 = arith.constant 0 : i32
    %c0_i32_0 = arith.constant 0 : i32
    %c0_i32_1 = arith.constant 0 : i32
    %c0_i32_2 = arith.constant 0 : i32
    return %c0_i32, %c0_i32_0, %c0_i32_1 : i32, i32, i32
  }
  func.func @transform_6(%arg0: i32) -> (i32, i32, i32) {
    %c0_i32 = arith.constant 0 : i32
    %c0_i32_0 = arith.constant 0 : i32
    %c0_i32_1 = arith.constant 0 : i32
    %c0_i32_2 = arith.constant 0 : i32
    return %c0_i32, %c0_i32_0, %c0_i32_1 : i32, i32, i32
  }
  func.func @transform_7(%arg0: i32) -> (i32, i32, i32) {
    %c0_i32 = arith.constant 0 : i32
    %c0_i32_0 = arith.constant 0 : i32
    %c0_i32_1 = arith.constant 0 : i32
    %c0_i32_2 = arith.constant 0 : i32
    return %c0_i32, %c0_i32_0, %c0_i32_1 : i32, i32, i32
  }
  func.func @transform_8(%arg0: i32) -> (i32, i32, i32) {
    %c0_i32 = arith.constant 0 : i32
    %c0_i32_0 = arith.constant 0 : i32
    %c0_i32_1 = arith.constant 0 : i32
    %c0_i32_2 = arith.constant 0 : i32
    return %c0_i32, %c0_i32_0, %c0_i32_1 : i32, i32, i32
  }
  func.func @transform_9(%arg0: i32) -> (i32, i32, i32) {
    %c0_i32 = arith.constant 0 : i32
    %c0_i32_0 = arith.constant 0 : i32
    %c0_i32_1 = arith.constant 0 : i32
    %c0_i32_2 = arith.constant 0 : i32
    return %c0_i32, %c0_i32_0, %c0_i32_1 : i32, i32, i32
  }
  func.func @transform_10(%arg0: i32) -> (i32, i32) {
    %c0_i32 = arith.constant 0 : i32
    %c0_i32_0 = arith.constant 0 : i32
    %c0_i32_1 = arith.constant 0 : i32
    return %c0_i32, %c0_i32_0 : i32, i32
  }
  func.func @transform_11(%arg0: i32) -> (i32, i32) {
    %c0_i32 = arith.constant 0 : i32
    %c0_i32_0 = arith.constant 0 : i32
    return %arg0, %c0_i32 : i32, i32
  }
}

</mosaic_0001>

<llo_original>
// kernel: tpu_custom_call.1
$region0: #{tpu_custom_call.1}
  #allocation0 [shape = 'u32[]', space=smem, size = 0x4, offset = 0x4, fixed_abs, tag = 'smem constant byte address 0x4 - core index']
  #allocation1 [shape = 'u32[72,128]{1,0:T(1,128)}', space=vmem, size = 0x9000, scoped, tag = 'internal scratch']
  %s0 = inlined_call_operand.vmem [shape: s32[16,1], index: 0, kind: input, shape index: {}]
  %s1 = inlined_call_operand.vmem [shape: bf16[256,32], index: 1, kind: input, shape index: {}]
  %s2 = inlined_call_operand.vmem [shape: f32[16,32], index: 2, kind: input, shape index: {}]
  %s3 = inlined_call_operand.vmem [shape: f32[2,8,32], index: 3, kind: input, shape index: {}]
  %s4 = inlined_call_operand.vmem [shape: f32[2,96,1], index: 4, kind: input, shape index: {}]
  %s5 = inlined_call_operand.vmem [shape: f32[2,1,128], index: 5, kind: input, shape index: {}]
  %s6 = inlined_call_operand.vmem [shape: bf16[2,96,32], index: 6, kind: input, shape index: {}]
  %s7 = inlined_call_operand.vmem [shape: bf16[2,32,32], index: 7, kind: input, shape index: {}]
  %s8 = inlined_call_operand.vmem [shape: bf16[2,32,128], index: 8, kind: input, shape index: {}]
  %s9 = inlined_call_operand.vmem [shape: bf16[2,128,32], index: 9, kind: input, shape index: {}]
  %s10 = inlined_call_operand.vmem [shape: bf16[32,128], index: 10, kind: input, shape index: {}]
  %s11 = inlined_call_operand.hbm [shape: f32[16,128], index: 11, kind: output, shape index: {}]
  %s12 = sld [smem:[#allocation0]]
  $region77: #{tpu_custom_call.1} parent=0
    _
  %s14 = ssub.s32 1, %s12
  %s15 = scalar_select 0, %s14, %s12
  $region1: #{tpu_custom_call.1} parent=0
    #allocation2 [shape = 'u8[8192]{0}', space=vmem, size = 0x2000, scoped, tag = 'output window, operand 0']
    #allocation3 [shape = 's32[2]{0}', space=sflag, size = 0x8, scoped, tag = 'scoped memory for tpu_custom_call.1']
    %16 = vsyncpa [#allocation3], 0
    %s17 = scalar_lea.sflag [#allocation3], 1
    %18 = vsyncpa %s17, 0
    loop: start=0, step=1, limit=4
    $region2: #{tpu_custom_call.1} parent=1 // loop_pre_header
      _
    $region3: #{tpu_custom_call.1} parent=1 // loop_header
      %s20 = sphi 0, %s24
      %p21 = scmp.ge.s32.totalorder %s20, 4
      %s30 = sphi 0, %s32
      %s33 = sphi 0, %s30
      %s34 = sphi 0, %s33
      %s50 = sphi 0, %s34
      %s54 = sphi 0, %s54
      %s56 = sphi 0, %s54
      %s57 = sphi 0, %s56
      %s71 = sphi 0, %s57
      %s75 = sphi 0, %s75
      %s77 = sphi 0, %s75
      %s78 = sphi 0, %s77
      %s92 = sphi 0, %s78
      %s96 = sphi 0, %s96
      %s98 = sphi 0, %s96
      %s99 = sphi 0, %s98
      %s113 = sphi 0, %s99
      %s117 = sphi 0, %s117
      %s119 = sphi 0, %s117
      %s120 = sphi 0, %s119
      %s134 = sphi 0, %s120
      %s138 = sphi 0, %s138
      %s140 = sphi 0, %s138
      %s141 = sphi 0, %s140
      %s155 = sphi 0, %s141
      %s159 = sphi 0, %s159
      %s161 = sphi 0, %s159
      %s162 = sphi 0, %s161
      %s176 = sphi 0, %s162
      %s180 = sphi 0, %s180
      %s182 = sphi 0, %s180
      %s183 = sphi 0, %s182
      %s197 = sphi 0, %s183
      %s201 = sphi 0, %s201
      %s203 = sphi 0, %s201
      %s204 = sphi 0, %s203
      %s218 = sphi 0, %s204
      %s222 = sphi 0, %s222
      %s224 = sphi 0, %s222
      %s225 = sphi 0, %s224
      %s239 = sphi 0, %s225
      %s243 = sphi 0, %s243
      %s245 = sphi 0, %s243
      %s246 = sphi 0, %s245
      %s260 = sphi 0, %s246
      %s266 = sphi 0, %s268
      %s269 = sphi 0, %s266
      %s270 = sphi 0, %s269
      %s286 = sphi 0, %s270
    $region4: #{tpu_custom_call.1} parent=1 // loop_header_branch
      %23 = sbr.rel (%p21) target = $region8
    $region5: #{tpu_custom_call.1} parent=1 // loop_body
      %s25 = ssub.s32 %s20, 1
      %s26 = ssub.s32 %s20, 2
      %s27 = sadd.s32 %s20, 1
      %s28 = ssub.s32 %s20, %s27
      %p29 = scmp.eq.s32.totalorder %s28, 0
      %s31 = sadd.s32 %s30, 1
      %s32 = scalar_select %p29, %s30, %s31
      %p35 = pneg %p29
      %p36 = scmp.eq.s32.totalorder %s20, 1
      %p37 = por %p35, %p36
      %p38 = scmp.ne.s32.totalorder %s30, %s33
      %p39 = scmp.eq.s32.totalorder %s20, 0
      %p40 = por %p38, %p39
      %p41 = scmp.ne.s32.totalorder %s30, %s33
      %p42 = scmp.eq.s32.totalorder %s25, 1
      %p43 = por %p41, %p42
      %p44 = scmp.ne.s32.totalorder %s33, %s34
      %p45 = scmp.eq.s32.totalorder %s25, 0
      %p46 = por %p44, %p45
      %p47 = scmp.ne.s32.totalorder %s33, %s34
      %p48 = scmp.eq.s32.totalorder %s26, 1
      %p49 = por %p47, %p48
      %p51 = scmp.ne.s32.totalorder %s34, %s50
      %p52 = scmp.eq.s32.totalorder %s26, 0
      %p53 = por %p51, %p52
      %s55 = sadd.s32 %s54, 1
      %p58 = scmp.eq.s32.totalorder %s20, 1
      %p59 = scmp.ne.s32.totalorder %s54, %s56
      %p60 = scmp.eq.s32.totalorder %s20, 0
      %p61 = por %p59, %p60
      %p62 = scmp.ne.s32.totalorder %s54, %s56
      %p63 = scmp.eq.s32.totalorder %s25, 1
      %p64 = por %p62, %p63
      %p65 = scmp.ne.s32.totalorder %s56, %s57
      %p66 = scmp.eq.s32.totalorder %s25, 0
      %p67 = por %p65, %p66
      %p68 = scmp.ne.s32.totalorder %s56, %s57
      %p69 = scmp.eq.s32.totalorder %s26, 1
      %p70 = por %p68, %p69
      %p72 = scmp.ne.s32.totalorder %s57, %s71
      %p73 = scmp.eq.s32.totalorder %s26, 0
      %p74 = por %p72, %p73
      %s76 = sadd.s32 %s75, 1
      %p79 = scmp.eq.s32.totalorder %s20, 1
      %p80 = scmp.ne.s32.totalorder %s75, %s77
      %p81 = scmp.eq.s32.totalorder %s20, 0
      %p82 = por %p80, %p81
      %p83 = scmp.ne.s32.totalorder %s75, %s77
      %p84 = scmp.eq.s32.totalorder %s25, 1
      %p85 = por %p83, %p84
      %p86 = scmp.ne.s32.totalorder %s77, %s78
      %p87 = scmp.eq.s32.totalorder %s25, 0
      %p88 = por %p86, %p87
      %p89 = scmp.ne.s32.totalorder %s77, %s78
      %p90 = scmp.eq.s32.totalorder %s26, 1
      %p91 = por %p89, %p90
      %p93 = scmp.ne.s32.totalorder %s78, %s92
      %p94 = scmp.eq.s32.totalorder %s26, 0
      %p95 = por %p93, %p94
      %s97 = sadd.s32 %s96, 1
      %p100 = scmp.eq.s32.totalorder %s20, 1
      %p101 = scmp.ne.s32.totalorder %s96, %s98
      %p102 = scmp.eq.s32.totalorder %s20, 0
      %p103 = por %p101, %p102
      %p104 = scmp.ne.s32.totalorder %s96, %s98
      %p105 = scmp.eq.s32.totalorder %s25, 1
      %p106 = por %p104, %p105
      %p107 = scmp.ne.s32.totalorder %s98, %s99
      %p108 = scmp.eq.s32.totalorder %s25, 0
      %p109 = por %p107, %p108
      %p110 = scmp.ne.s32.totalorder %s98, %s99
      %p111 = scmp.eq.s32.totalorder %s26, 1
      %p112 = por %p110, %p111
      %p114 = scmp.ne.s32.totalorder %s99, %s113
      %p115 = scmp.eq.s32.totalorder %s26, 0
      %p116 = por %p114, %p115
      %s118 = sadd.s32 %s117, 1
      %p121 = scmp.eq.s32.totalorder %s20, 1
      %p122 = scmp.ne.s32.totalorder %s117, %s119
      %p123 = scmp.eq.s32.totalorder %s20, 0
      %p124 = por %p122, %p123
      %p125 = scmp.ne.s32.totalorder %s117, %s119
      %p126 = scmp.eq.s32.totalorder %s25, 1
      %p127 = por %p125, %p126
      %p128 = scmp.ne.s32.totalorder %s119, %s120
      %p129 = scmp.eq.s32.totalorder %s25, 0
      %p130 = por %p128, %p129
      %p131 = scmp.ne.s32.totalorder %s119, %s120
      %p132 = scmp.eq.s32.totalorder %s26, 1
      %p133 = por %p131, %p132
      %p135 = scmp.ne.s32.totalorder %s120, %s134
      %p136 = scmp.eq.s32.totalorder %s26, 0
      %p137 = por %p135, %p136
      %s139 = sadd.s32 %s138, 1
      %p142 = scmp.eq.s32.totalorder %s20, 1
      %p143 = scmp.ne.s32.totalorder %s138, %s140
      %p144 = scmp.eq.s32.totalorder %s20, 0
      %p145 = por %p143, %p144
      %p146 = scmp.ne.s32.totalorder %s138, %s140
      %p147 = scmp.eq.s32.totalorder %s25, 1
      %p148 = por %p146, %p147
      %p149 = scmp.ne.s32.totalorder %s140, %s141
      %p150 = scmp.eq.s32.totalorder %s25, 0
      %p151 = por %p149, %p150
      %p152 = scmp.ne.s32.totalorder %s140, %s141
      %p153 = scmp.eq.s32.totalorder %s26, 1
      %p154 = por %p152, %p153
      %p156 = scmp.ne.s32.totalorder %s141, %s155
      %p157 = scmp.eq.s32.totalorder %s26, 0
      %p158 = por %p156, %p157
      %s160 = sadd.s32 %s159, 1
      %p163 = scmp.eq.s32.totalorder %s20, 1
      %p164 = scmp.ne.s32.totalorder %s159, %s161
      %p165 = scmp.eq.s32.totalorder %s20, 0
      %p166 = por %p164, %p165
      %p167 = scmp.ne.s32.totalorder %s159, %s161
      %p168 = scmp.eq.s32.totalorder %s25, 1
      %p169 = por %p167, %p168
      %p170 = scmp.ne.s32.totalorder %s161, %s162
      %p171 = scmp.eq.s32.totalorder %s25, 0
      %p172 = por %p170, %p171
      %p173 = scmp.ne.s32.totalorder %s161, %s162
      %p174 = scmp.eq.s32.totalorder %s26, 1
      %p175 = por %p173, %p174
      %p177 = scmp.ne.s32.totalorder %s162, %s176
      %p178 = scmp.eq.s32.totalorder %s26, 0
      %p179 = por %p177, %p178
      %s181 = sadd.s32 %s180, 1
      %p184 = scmp.eq.s32.totalorder %s20, 1
      %p185 = scmp.ne.s32.totalorder %s180, %s182
      %p186 = scmp.eq.s32.totalorder %s20, 0
      %p187 = por %p185, %p186
      %p188 = scmp.ne.s32.totalorder %s180, %s182
      %p189 = scmp.eq.s32.totalorder %s25, 1
      %p190 = por %p188, %p189
      %p191 = scmp.ne.s32.totalorder %s182, %s183
      %p192 = scmp.eq.s32.totalorder %s25, 0
      %p193 = por %p191, %p192
      %p194 = scmp.ne.s32.totalorder %s182, %s183
      %p195 = scmp.eq.s32.totalorder %s26, 1
      %p196 = por %p194, %p195
      %p198 = scmp.ne.s32.totalorder %s183, %s197
      %p199 = scmp.eq.s32.totalorder %s26, 0
      %p200 = por %p198, %p199
      %s202 = sadd.s32 %s201, 1
      %p205 = scmp.eq.s32.totalorder %s20, 1
      %p206 = scmp.ne.s32.totalorder %s201, %s203
      %p207 = scmp.eq.s32.totalorder %s20, 0
      %p208 = por %p206, %p207
      %p209 = scmp.ne.s32.totalorder %s201, %s203
      %p210 = scmp.eq.s32.totalorder %s25, 1
      %p211 = por %p209, %p210
      %p212 = scmp.ne.s32.totalorder %s203, %s204
      %p213 = scmp.eq.s32.totalorder %s25, 0
      %p214 = por %p212, %p213
      %p215 = scmp.ne.s32.totalorder %s203, %s204
      %p216 = scmp.eq.s32.totalorder %s26, 1
      %p217 = por %p215, %p216
      %p219 = scmp.ne.s32.totalorder %s204, %s218
      %p220 = scmp.eq.s32.totalorder %s26, 0
      %p221 = por %p219, %p220
      %s223 = sadd.s32 %s222, 1
      %p226 = scmp.eq.s32.totalorder %s20, 1
      %p227 = scmp.ne.s32.totalorder %s222, %s224
      %p228 = scmp.eq.s32.totalorder %s20, 0
      %p229 = por %p227, %p228
      %p230 = scmp.ne.s32.totalorder %s222, %s224
      %p231 = scmp.eq.s32.totalorder %s25, 1
      %p232 = por %p230, %p231
      %p233 = scmp.ne.s32.totalorder %s224, %s225
      %p234 = scmp.eq.s32.totalorder %s25, 0
      %p235 = por %p233, %p234
      %p236 = scmp.ne.s32.totalorder %s224, %s225
      %p237 = scmp.eq.s32.totalorder %s26, 1
      %p238 = por %p236, %p237
      %p240 = scmp.ne.s32.totalorder %s225, %s239
      %p241 = scmp.eq.s32.totalorder %s26, 0
      %p242 = por %p240, %p241
      %s244 = sadd.s32 %s243, 1
      %p247 = scmp.eq.s32.totalorder %s20, 1
      %p248 = scmp.ne.s32.totalorder %s243, %s245
      %p249 = scmp.eq.s32.totalorder %s20, 0
      %p250 = por %p248, %p249
      %p251 = scmp.ne.s32.totalorder %s243, %s245
      %p252 = scmp.eq.s32.totalorder %s25, 1
      %p253 = por %p251, %p252
      %p254 = scmp.ne.s32.totalorder %s245, %s246
      %p255 = scmp.eq.s32.totalorder %s25, 0
      %p256 = por %p254, %p255
      %p257 = scmp.ne.s32.totalorder %s245, %s246
      %p258 = scmp.eq.s32.totalorder %s26, 1
      %p259 = por %p257, %p258
      %p261 = scmp.ne.s32.totalorder %s246, %s260
      %p262 = scmp.eq.s32.totalorder %s26, 0
      %p263 = por %p261, %p262
      %s264 = ssub.s32 %s20, %s27
      %p265 = scmp.eq.s32.totalorder %s264, 0
      %s267 = sadd.s32 %s266, 1
      %s268 = scalar_select %p265, %s266, %s267
      %p271 = pneg %p265
      %p272 = scmp.eq.s32.totalorder %s20, 1
      %p273 = por %p271, %p272
      %p274 = scmp.ne.s32.totalorder %s266, %s269
      %p275 = scmp.eq.s32.totalorder %s20, 0
      %p276 = por %p274, %p275
      %p277 = scmp.ne.s32.totalorder %s266, %s269
      %p278 = scmp.eq.s32.totalorder %s25, 1
      %p279 = por %p277, %p278
      %p280 = scmp.ne.s32.totalorder %s269, %s270
      %p281 = scmp.eq.s32.totalorder %s25, 0
      %p282 = por %p280, %p281
      %p283 = scmp.ne.s32.totalorder %s269, %s270
      %p284 = scmp.eq.s32.totalorder %s26, 1
      %p285 = por %p283, %p284
      %p287 = scmp.ne.s32.totalorder %s270, %s286
      %p288 = scmp.eq.s32.totalorder %s26, 0
      %p289 = por %p287, %p288
      %p290 = scmp.le.s32.totalorder 1, %s20
      %p291 = scmp.lt.s32.totalorder %s20, 3
      %p292 = pnand %p290, %p291
      %p293 = pneg %p292
      // Predicated region
      $region9: #{tpu_custom_call.1} parent=5 // pred_check
        _
      $region10: #{tpu_custom_call.1} parent=5 // pred_check_branch
        %295 = sbr.rel (%p292) target = $region12
      $region11: #{tpu_custom_call.1} parent=5 // pred_region
        %s296 = ssub.s32 %s20, 1
        // Predicated region
        $region13: #{tpu_custom_call.1} parent=11 // pred_check
          %p297 = pneg %p67
        $region14: #{tpu_custom_call.1} parent=11 // pred_check_branch
          %299 = sbr.rel (%p297) target = $region16
        $region15: #{tpu_custom_call.1} parent=11 // pred_region
          _
        $region16: #{tpu_custom_call.1} parent=11 // pred_fallthru
          _
        // Predicated region
        $region17: #{tpu_custom_call.1} parent=11 // pred_check
          %p300 = pneg %p88
        $region18: #{tpu_custom_call.1} parent=11 // pred_check_branch
          %302 = sbr.rel (%p300) target = $region20
        $region19: #{tpu_custom_call.1} parent=11 // pred_region
          _
        $region20: #{tpu_custom_call.1} parent=11 // pred_fallthru
          _
        // Predicated region
        $region21: #{tpu_custom_call.1} parent=11 // pred_check
          %p303 = pneg %p109
        $region22: #{tpu_custom_call.1} parent=11 // pred_check_branch
          %305 = sbr.rel (%p303) target = $region24
        $region23: #{tpu_custom_call.1} parent=11 // pred_region
          _
        $region24: #{tpu_custom_call.1} parent=11 // pred_fallthru
          _
        // Predicated region
        $region25: #{tpu_custom_call.1} parent=11 // pred_check
          %p306 = pneg %p130
        $region26: #{tpu_custom_call.1} parent=11 // pred_check_branch
          %308 = sbr.rel (%p306) target = $region28
        $region27: #{tpu_custom_call.1} parent=11 // pred_region
          _
        $region28: #{tpu_custom_call.1} parent=11 // pred_fallthru
          _
        // Predicated region
        $region29: #{tpu_custom_call.1} parent=11 // pred_check
          %p309 = pneg %p151
        $region30: #{tpu_custom_call.1} parent=11 // pred_check_branch
          %311 = sbr.rel (%p309) target = $region32
        $region31: #{tpu_custom_call.1} parent=11 // pred_region
          _
        $region32: #{tpu_custom_call.1} parent=11 // pred_fallthru
          _
        // Predicated region
        $region33: #{tpu_custom_call.1} parent=11 // pred_check
          %p312 = pneg %p172
        $region34: #{tpu_custom_call.1} parent=11 // pred_check_branch
          %314 = sbr.rel (%p312) target = $region36
        $region35: #{tpu_custom_call.1} parent=11 // pred_region
          _
        $region36: #{tpu_custom_call.1} parent=11 // pred_fallthru
          _
        // Predicated region
        $region37: #{tpu_custom_call.1} parent=11 // pred_check
          %p315 = pneg %p193
        $region38: #{tpu_custom_call.1} parent=11 // pred_check_branch
          %317 = sbr.rel (%p315) target = $region40
        $region39: #{tpu_custom_call.1} parent=11 // pred_region
          _
        $region40: #{tpu_custom_call.1} parent=11 // pred_fallthru
          _
        // Predicated region
        $region41: #{tpu_custom_call.1} parent=11 // pred_check
          %p318 = pneg %p214
        $region42: #{tpu_custom_call.1} parent=11 // pred_check_branch
          %320 = sbr.rel (%p318) target = $region44
        $region43: #{tpu_custom_call.1} parent=11 // pred_region
          _
        $region44: #{tpu_custom_call.1} parent=11 // pred_fallthru
          _
        // Predicated region
        $region45: #{tpu_custom_call.1} parent=11 // pred_check
          %p321 = pneg %p235
        $region46: #{tpu_custom_call.1} parent=11 // pred_check_branch
          %323 = sbr.rel (%p321) target = $region48
        $region47: #{tpu_custom_call.1} parent=11 // pred_region
          _
        $region48: #{tpu_custom_call.1} parent=11 // pred_fallthru
          _
        // Predicated region
        $region49: #{tpu_custom_call.1} parent=11 // pred_check
          %p324 = pneg %p256
        $region50: #{tpu_custom_call.1} parent=11 // pred_check_branch
          %326 = sbr.rel (%p324) target = $region52
        $region51: #{tpu_custom_call.1} parent=11 // pred_region
          _
        $region52: #{tpu_custom_call.1} parent=11 // pred_fallthru
          _
      $region12: #{tpu_custom_call.1} parent=5 // pred_fallthru
        _
      %p327 = scmp.lt.s32.totalorder %s20, 2
      // Predicated region
      $region53: #{tpu_custom_call.1} parent=5 // pred_check
        %p328 = pneg %p327
      $region54: #{tpu_custom_call.1} parent=5 // pred_check_branch
        %330 = sbr.rel (%p328) target = $region56
      $region55: #{tpu_custom_call.1} parent=5 // pred_region
        // Predicated region
        $region57: #{tpu_custom_call.1} parent=55 // pred_check
          %p331 = pneg %p40
        $region58: #{tpu_custom_call.1} parent=55 // pred_check_branch
          %333 = sbr.rel (%p331) target = $region60
        $region59: #{tpu_custom_call.1} parent=55 // pred_region
          %p334 = scmp.lt.s32.totalorder %s20, 1
          %s335 = scalar_select %p334, %s20, 1
          %s336 = smul.addr %s335, 8
          %s337 = scalar_lea.vmem %s0, %s336
        $region60: #{tpu_custom_call.1} parent=55 // pred_fallthru
          _
      $region56: #{tpu_custom_call.1} parent=5 // pred_fallthru
        _
      %p338 = scmp.le.s32.totalorder 1, %s20
      %p339 = scmp.lt.s32.totalorder %s20, 3
      %p340 = pnand %p338, %p339
      %p341 = pneg %p340
      // Predicated region
      $region61: #{tpu_custom_call.1} parent=5 // pred_check
        _
      $region62: #{tpu_custom_call.1} parent=5 // pred_check_branch
        %343 = sbr.rel (%p340) target = $region64
      $region63: #{tpu_custom_call.1} parent=5 // pred_region
        %s344 = ssub.s32 %s20, 1
        %p345 = scmp.lt.s32.totalorder %s25, 1
        %s346 = scalar_select %p345, %s25, 1
        %s347 = smul.addr %s346, 8
        %s348 = scalar_lea.vmem %s0, %s347
        %p349 = pneg %p46
        %p350 = pneg %p43
        %p351 = pneg %p67
        %p352 = pneg %p64
        %p353 = pneg %p88
        %p354 = pneg %p85
        %p355 = pneg %p109
        %p356 = pneg %p106
        %p357 = pneg %p130
        %p358 = pneg %p127
        %p359 = pneg %p151
        %p360 = pneg %p148
        %p361 = pneg %p172
        %p362 = pneg %p169
        %p363 = pneg %p193
        %p364 = pneg %p190
        %p365 = pneg %p214
        %p366 = pneg %p211
        %p367 = pneg %p235
        %p368 = pneg %p232
        %p369 = pneg %p256
        %p370 = pneg %p253
        %p371 = pneg %p282
        %p372 = pneg %p279
        %s373 = sand.u32 %s269, 1
        %s374 = scalar_lea.sflag [#allocation3], %s373
        %s375 = sand.u32 %s269, 1
        %s376 = smul.addr %s375, 8
        %s377 = scalar_lea.vmem [#allocation2], %s376
        %p378 = scmp.lt.s32.totalorder %s25, 1
        %s379 = scalar_select %p378, %s25, 1
        %s380 = smul.addr %s379, 8
        %s381 = scalar_lea.vmem %s0, %s380
        %v383 = vld [vmem:[%s3] sm:$0xff]
        %v384 = vld [vmem:[%s3 + $0x8] sm:$0xff]
        %v385 = vld [vmem:[%s381] sm:$0xff]
        %v386 = vlaneseq
        %v387 = vand.u32 %v386, 127
        %v388 = vadd.s32 %v387, 128
        %389 = vset.pattern.permute.xlu0 0
        %390 = vperm.xlu0 %389, %v385
        %v391 = vpop.permute.xlu0 %390
        %vm392 = vcmp.eq.s32.totalorder %v387, %v391
        %vm393 = vcmp.eq.s32.totalorder %v388, %v391
        %v394 = vadd.s32 %v385, 128
        %395 = vset.pattern.permute.xlu0 0
        %396 = vperm.xlu0 %395, %v394
        %v397 = vpop.permute.xlu0 %396
        %vm398 = vcmp.eq.s32.totalorder %v387, %v397
        %vm399 = vcmp.eq.s32.totalorder %v388, %v397
        %vm400 = vmor %vm392, %vm398
        %vm401 = vmor %vm393, %vm399
        %v402 = vsel %vm400, 1.0, 0.0
        %v403 = vsel %vm401, 1.0, 0.0
        %v404 = vpack.c.bf16 %v402, %v402
        %v405 = vpack.c.bf16 %v403, %v403
        %v406 = vld [vmem:[%s1] sm:$0xf]
        %v407 = vld [vmem:[%s1 + $0x4] sm:$0xf]
        %v408 = vld [vmem:[%s1 + $0x8] sm:$0xf]
        %v409 = vld [vmem:[%s1 + $0xc] sm:$0xf]
        %v410 = vld [vmem:[%s1 + $0x10] sm:$0xf]
        %v411 = vld [vmem:[%s1 + $0x14] sm:$0xf]
        %v412 = vld [vmem:[%s1 + $0x18] sm:$0xf]
        %v413 = vld [vmem:[%s1 + $0x1c] sm:$0xf]
        %v414 = vld [vmem:[%s1 + $0x20] sm:$0xf]
        %v415 = vld [vmem:[%s1 + $0x24] sm:$0xf]
        %v416 = vld [vmem:[%s1 + $0x28] sm:$0xf]
        %v417 = vld [vmem:[%s1 + $0x2c] sm:$0xf]
        %v418 = vld [vmem:[%s1 + $0x30] sm:$0xf]
        %v419 = vld [vmem:[%s1 + $0x34] sm:$0xf]
        %v420 = vld [vmem:[%s1 + $0x38] sm:$0xf]
        %v421 = vld [vmem:[%s1 + $0x3c] sm:$0xf]
        %v422 = vld [vmem:[%s1 + $0x40] sm:$0xf]
        %v423 = vld [vmem:[%s1 + $0x44] sm:$0xf]
        %v424 = vld [vmem:[%s1 + $0x48] sm:$0xf]
        %v425 = vld [vmem:[%s1 + $0x4c] sm:$0xf]
        %v426 = vld [vmem:[%s1 + $0x50] sm:$0xf]
        %v427 = vld [vmem:[%s1 + $0x54] sm:$0xf]
        %v428 = vld [vmem:[%s1 + $0x58] sm:$0xf]
        %v429 = vld [vmem:[%s1 + $0x5c] sm:$0xf]
        %v430 = vld [vmem:[%s1 + $0x60] sm:$0xf]
        %v431 = vld [vmem:[%s1 + $0x64] sm:$0xf]
        %v432 = vld [vmem:[%s1 + $0x68] sm:$0xf]
        %v433 = vld [vmem:[%s1 + $0x6c] sm:$0xf]
        %v434 = vld [vmem:[%s1 + $0x70] sm:$0xf]
        %v435 = vld [vmem:[%s1 + $0x74] sm:$0xf]
        %v436 = vld [vmem:[%s1 + $0x78] sm:$0xf]
        %v437 = vld [vmem:[%s1 + $0x7c] sm:$0xf]
        %v438 = vld [vmem:[%s2] sm:$0xff]
        %v471 = vunpack.c.l.b16 %v406
        %v472 = vunpack.c.l.b16 %v407
        %v473 = vunpack.c.l.b16 %v408
        %v474 = vunpack.c.l.b16 %v409
        %v475 = vunpack.c.l.b16 %v410
        %v476 = vunpack.c.l.b16 %v411
        %v477 = vunpack.c.l.b16 %v412
        %v478 = vunpack.c.l.b16 %v413
        %v479 = vunpack.c.l.b16 %v414
        %v480 = vunpack.c.l.b16 %v415
        %v481 = vunpack.c.l.b16 %v416
        %v482 = vunpack.c.l.b16 %v417
        %v483 = vunpack.c.l.b16 %v418
        %v484 = vunpack.c.l.b16 %v419
        %v485 = vunpack.c.l.b16 %v420
        %v486 = vunpack.c.l.b16 %v421
        %v487 = vunpack.c.l.b16 %v422
        %v488 = vunpack.c.l.b16 %v423
        %v489 = vunpack.c.l.b16 %v424
        %v490 = vunpack.c.l.b16 %v425
        %v491 = vunpack.c.l.b16 %v426
        %v492 = vunpack.c.l.b16 %v427
        %v493 = vunpack.c.l.b16 %v428
        %v494 = vunpack.c.l.b16 %v429
        %v495 = vunpack.c.l.b16 %v430
        %v496 = vunpack.c.l.b16 %v431
        %v497 = vunpack.c.l.b16 %v432
        %v498 = vunpack.c.l.b16 %v433
        %v499 = vunpack.c.l.b16 %v434
        %v500 = vunpack.c.l.b16 %v435
        %v501 = vunpack.c.l.b16 %v436
        %v502 = vunpack.c.l.b16 %v437
        %v503 = vpack.c.b16 %v472, %v471
        %v504 = vpack.c.b16 %v474, %v473
        %v505 = vpack.c.b16 %v476, %v475
        %v506 = vpack.c.b16 %v478, %v477
        %v507 = vpack.c.b16 %v480, %v479
        %v508 = vpack.c.b16 %v482, %v481
        %v509 = vpack.c.b16 %v484, %v483
        %v510 = vpack.c.b16 %v486, %v485
        %v511 = vpack.c.b16 %v488, %v487
        %v512 = vpack.c.b16 %v490, %v489
        %v513 = vpack.c.b16 %v492, %v491
        %v514 = vpack.c.b16 %v494, %v493
        %v515 = vpack.c.b16 %v496, %v495
        %v516 = vpack.c.b16 %v498, %v497
        %v517 = vpack.c.b16 %v500, %v499
        %v518 = vpack.c.b16 %v502, %v501
        %535 = vmatpush.bf16.msra.mxu0 %v510
        %536 = vmatpush.bf16.msra.mxu0 %v509
        %537 = vmatpush.bf16.msra.mxu0 %v508
        %538 = vmatpush.bf16.msra.mxu0 %v507
        %539 = vmatpush.bf16.msra.mxu0 %v506
        %540 = vmatpush.bf16.msra.mxu0 %v505
        %541 = vmatpush.bf16.msra.mxu0 %v504
        %542 = vmatpush.bf16.msra.mxu0 %v503
        %543 = vmatmul.bf16.gmra.mxu0 %v404
        %v544 = vpop.f32.mrf.mxu0
        %v545 = vadd.f32 %v438, %v544
        %v546 = vpop.f32.mrf.mxu0
        %547 = vdwg.mxu0
        %548 = vmatpush.bf16.msra.mxu0 %v518
        %549 = vmatpush.bf16.msra.mxu0 %v517
        %550 = vmatpush.bf16.msra.mxu0 %v516
        %551 = vmatpush.bf16.msra.mxu0 %v515
        %552 = vmatpush.bf16.msra.mxu0 %v514
        %553 = vmatpush.bf16.msra.mxu0 %v513
        %554 = vmatpush.bf16.msra.mxu0 %v512
        %555 = vmatpush.bf16.msra.mxu0 %v511
        %556 = vmatmul.bf16.gmra.mxu0 %v405
        %v557 = vpop.f32.mrf.mxu0
        %v558 = vadd.f32 %v545, %v557
        %v559 = vpop.f32.mrf.mxu0
        %560 = vdwg.mxu0
        %vm561 = vcmask 261120
        %v562 = vsel %vm561, %v558, 0.0
        %563 = vadd.xlane.f32.xlu0 %v562
        %v564 = vpop.xlane.xlu0 %563
        %v565 = vrcp.pop 32.0
        %v566 = vmul.f32 32.0, %v565
        %v567 = vsub.f32 1.0, %v566
        %v568 = vmul.f32 %v565, %v567
        %v569 = vadd.f32 %v565, %v568
        %vm570 = vweird.f32 %v565
        %v571 = vsel %vm570, %v565, %v569
        %v572 = vmul.f32 %v564, %v571
        %v573 = vmul.f32 %v558, %v558
        %v574 = vsel %vm561, %v573, 0.0
        %575 = vadd.xlane.f32.xlu0 %v574
        %v576 = vpop.xlane.xlu0 %575
        %v577 = vmul.f32 %v576, %v571
        %v578 = vmul.f32 %v572, %v572
        %v579 = vsub.f32 %v577, %v578
        %v580 = vmax.f32 %v579, 0.0
        %v581 = vsub.f32 %v558, %v572
        %v582 = vadd.f32 %v580, 1e-05
        %v583 = vrsqrt.pop %v582
        %v584 = vmul.f32 %v583, %v582
        %v585 = vmul.f32 %v584, %v583
        %v586 = vmul.f32 0.5, %v585
        %v587 = vsub.f32 1.5, %v586
        %v588 = vmul.f32 %v583, %v587
        %vm589 = vweird.f32 %v582
        %vm590 = vweird.f32 %v583
        %vm591 = vmor %vm589, %vm590
        %v592 = vsel %vm591, %v583, %v588
        %v593 = vmul.f32 %v581, %v592
        %v594 = vperm.slane %v383, 0
        %v595 = vmul.f32 %v593, %v594
        %v596 = vperm.slane %v383, 1
        %v597 = vadd.f32 %v595, %v596
        %v598 = vpack.c.bf16 %v597, %v597
        %v599 = vld [vmem:[%s6] sm:$0xf]
        %v600 = vld [vmem:[%s6 + $0x4] sm:$0xf]
        %v601 = vld [vmem:[%s6 + $0x8] sm:$0xf]
        %v602 = vld [vmem:[%s6 + $0xc] sm:$0xf]
        %v603 = vld [vmem:[%s6 + $0x10] sm:$0xf]
        %v604 = vld [vmem:[%s6 + $0x14] sm:$0xf]
        %v605 = vld [vmem:[%s6 + $0x18] sm:$0xf]
        %v606 = vld [vmem:[%s6 + $0x1c] sm:$0xf]
        %v607 = vld [vmem:[%s6 + $0x20] sm:$0xf]
        %v608 = vld [vmem:[%s6 + $0x24] sm:$0xf]
        %v609 = vld [vmem:[%s6 + $0x28] sm:$0xf]
        %v610 = vld [vmem:[%s6 + $0x2c] sm:$0xf]
        %v611 = vld [vmem:[%s4] sm:$0xff]
        %v612 = vld [vmem:[%s4 + $0x8] sm:$0xff]
        %v613 = vld [vmem:[%s4 + $0x10] sm:$0xff]
        %v614 = vld [vmem:[%s4 + $0x18] sm:$0xff]
        %v615 = vld [vmem:[%s4 + $0x20] sm:$0xff]
        %v616 = vld [vmem:[%s4 + $0x28] sm:$0xff]
        %v617 = vld [vmem:[%s4 + $0x30] sm:$0xff]
        %v618 = vld [vmem:[%s4 + $0x38] sm:$0xff]
        %v619 = vld [vmem:[%s4 + $0x40] sm:$0xff]
        %v620 = vld [vmem:[%s4 + $0x48] sm:$0xff]
        %v621 = vld [vmem:[%s4 + $0x50] sm:$0xff]
        %v622 = vld [vmem:[%s4 + $0x58] sm:$0xff]
        %624 = vset.pattern.permute.xlu0 0
        %625 = vperm.xlu0 %624, %v611
        %v626 = vpop.permute.xlu0 %625
        %629 = vset.pattern.permute.xlu0 0
        %630 = vperm.xlu0 %629, %v612
        %v631 = vpop.permute.xlu0 %630
        %634 = vset.pattern.permute.xlu0 0
        %635 = vperm.xlu0 %634, %v613
        %v636 = vpop.permute.xlu0 %635
        %639 = vset.pattern.permute.xlu0 0
        %640 = vperm.xlu0 %639, %v614
        %v641 = vpop.permute.xlu0 %640
        %644 = vset.pattern.permute.xlu0 0
        %645 = vperm.xlu0 %644, %v615
        %v646 = vpop.permute.xlu0 %645
        %649 = vset.pattern.permute.xlu0 0
        %650 = vperm.xlu0 %649, %v616
        %v651 = vpop.permute.xlu0 %650
        %654 = vset.pattern.permute.xlu0 0
        %655 = vperm.xlu0 %654, %v617
        %v656 = vpop.permute.xlu0 %655
        %659 = vset.pattern.permute.xlu0 0
        %660 = vperm.xlu0 %659, %v618
        %v661 = vpop.permute.xlu0 %660
        %664 = vset.pattern.permute.xlu0 0
        %665 = vperm.xlu0 %664, %v619
        %v666 = vpop.permute.xlu0 %665
        %669 = vset.pattern.permute.xlu0 0
        %670 = vperm.xlu0 %669, %v620
        %v671 = vpop.permute.xlu0 %670
        %674 = vset.pattern.permute.xlu0 0
        %675 = vperm.xlu0 %674, %v621
        %v676 = vpop.permute.xlu0 %675
        %679 = vset.pattern.permute.xlu0 0
        %680 = vperm.xlu0 %679, %v622
        %v681 = vpop.permute.xlu0 %680
        %v695 = vunpack.c.l.b16 %v599
        %v696 = vunpack.c.l.b16 %v600
        %v697 = vunpack.c.l.b16 %v601
        %v698 = vunpack.c.l.b16 %v602
        %v699 = vunpack.c.l.b16 %v603
        %v700 = vunpack.c.l.b16 %v604
        %v701 = vunpack.c.l.b16 %v605
        %v702 = vunpack.c.l.b16 %v606
        %v703 = vunpack.c.l.b16 %v607
        %v704 = vunpack.c.l.b16 %v608
        %v705 = vunpack.c.l.b16 %v609
        %v706 = vunpack.c.l.b16 %v610
        %v707 = vpack.c.b16 %v696, %v695
        %v708 = vpack.c.b16 %v698, %v697
        %v709 = vpack.c.b16 %v700, %v699
        %v710 = vpack.c.b16 %v702, %v701
        %v711 = vpack.c.b16 %v704, %v703
        %v712 = vpack.c.b16 %v706, %v705
        %v714 = vsel %vm561, %v707, 0
        %v717 = vsel %vm561, %v708, 0
        %v720 = vsel %vm561, %v709, 0
        %v723 = vsel %vm561, %v710, 0
        %v726 = vsel %vm561, %v711, 0
        %v729 = vsel %vm561, %v712, 0
        %v732 = vsel %vm561, %v598, 0
        %734 = vmatpush.bf16.xpose.msra.mxu0 0
        %735 = vmatpush.bf16.xpose.msra.mxu0 0
        %736 = vmatpush.bf16.xpose.msra.mxu0 0
        %737 = vmatpush.bf16.xpose.msra.mxu0 0
        %738 = vmatpush.bf16.xpose.msra.mxu0 0
        %739 = vmatpush.bf16.xpose.msra.mxu0 0
        %740 = vmatpush.bf16.xpose.msra.mxu0 0
        %741 = vmatpush.bf16.xpose.msra.mxu0 %v732
        %742 = vmatmul.bf16.gmra.mxu0 %v714
        %v743 = vpop.f32.mrf.mxu0
        %v744 = vadd.f32 %v626, %v743
        %v745 = vpop.f32.mrf.mxu0
        %v746 = vadd.f32 %v631, %v745
        %747 = vmatmul.bf16.gmra.mxu0 %v717
        %v748 = vpop.f32.mrf.mxu0
        %v749 = vadd.f32 %v636, %v748
        %v750 = vpop.f32.mrf.mxu0
        %v751 = vadd.f32 %v641, %v750
        %752 = vmatmul.bf16.gmra.mxu0 %v720
        %v753 = vpop.f32.mrf.mxu0
        %v754 = vadd.f32 %v646, %v753
        %v755 = vpop.f32.mrf.mxu0
        %v756 = vadd.f32 %v651, %v755
        %757 = vmatmul.bf16.gmra.mxu0 %v723
        %v758 = vpop.f32.mrf.mxu0
        %v759 = vadd.f32 %v656, %v758
        %v760 = vpop.f32.mrf.mxu0
        %v761 = vadd.f32 %v661, %v760
        %762 = vmatmul.bf16.gmra.mxu0 %v726
        %v763 = vpop.f32.mrf.mxu0
        %v764 = vadd.f32 %v666, %v763
        %v765 = vpop.f32.mrf.mxu0
        %v766 = vadd.f32 %v671, %v765
        %767 = vmatmul.bf16.gmra.mxu0 %v729
        %v768 = vpop.f32.mrf.mxu0
        %v769 = vadd.f32 %v676, %v768
        %v770 = vpop.f32.mrf.mxu0
        %v771 = vadd.f32 %v681, %v770
        %772 = vdwg.mxu0
        %v773 = vmul.f32 %v744, 0.35355338
        %v774 = vmul.f32 %v746, 0.35355338
        %v775 = vmul.f32 %v749, 0.35355338
        %v776 = vmul.f32 %v751, 0.35355338
        %v777 = vpack.c.bf16 %v773, %v773
        %v778 = vpack.c.bf16 %v774, %v774
        %v779 = vpack.c.bf16 %v775, %v775
        %v780 = vpack.c.bf16 %v776, %v776
        %v781 = vpack.c.bf16 %v754, %v754
        %v782 = vpack.c.bf16 %v756, %v756
        %v783 = vpack.c.bf16 %v759, %v759
        %v784 = vpack.c.bf16 %v761, %v761
        %v785 = vpack.c.bf16 %v764, %v764
        %v786 = vpack.c.bf16 %v766, %v766
        %v787 = vpack.c.bf16 %v769, %v769
        %v788 = vpack.c.bf16 %v771, %v771
        %789 = vxpose.xlu0.c.b16.start [1/8] %v777, 128
        %790 = vxpose.xlu0.c.b16.cont [2/8] 0, 128
        %791 = vxpose.xlu0.c.b16.cont [3/8] 0, 128
        %792 = vxpose.xlu0.c.b16.cont [4/8] 0, 128
        %793 = vxpose.xlu0.c.b16.cont [5/8] 0, 128
        %794 = vxpose.xlu0.c.b16.cont [6/8] 0, 128
        %795 = vxpose.xlu0.c.b16.cont [7/8] 0, 128
        %796 = vxpose.xlu0.c.b16.end [8/8] 0, 128
        %v797 = vpop.trf.xlu0
        %v798 = vpop.trf.xlu0
        %v799 = vpop.trf.xlu0
        %v800 = vpop.trf.xlu0
        %v801 = vpop.trf.xlu0
        %v802 = vpop.trf.xlu0
        %v803 = vpop.trf.xlu0
        %v804 = vpop.trf.xlu0
        %vm805 = vcmask 64512
        %v807 = vsel %vm805, %v797, 0
        %vm809 = vcmask 1043456
        %v811 = vsel %vm809, %v781, 0
        %813 = vmatpush.bf16.msra.mxu0 0
        %814 = vmatpush.bf16.msra.mxu0 0
        %815 = vmatpush.bf16.msra.mxu0 0
        %816 = vmatpush.bf16.msra.mxu0 0
        %817 = vmatpush.bf16.msra.mxu0 0
        %818 = vmatpush.bf16.msra.mxu0 0
        %819 = vmatpush.bf16.msra.mxu0 0
        %820 = vmatpush.bf16.msra.mxu0 %v811
        %821 = vmatmul.bf16.gmra.mxu0 %v807
        %v822 = vpop.f32.mrf.mxu0
        %v823 = vadd.f32 0.0, %v822
        %v824 = vpop.f32.mrf.mxu0
        %825 = vdwg.mxu0
        %v826 = vsel %vm805, %v823, -inf
        %827 = vmax.xlane.f32.xlu0 %v826
        %v828 = vpop.xlane.xlu0 %827
        %v829 = vsub.f32 %v823, %v828
        %v830 = vmul.f32 %v829, 1.442695
        %v831 = vpow.pop %v830
        %v832 = vsel %vm805, %v831, 0.0
        %833 = vadd.xlane.f32.xlu0 %v832
        %v834 = vpop.xlane.xlu0 %833
        %v835 = vrcp.pop %v834
        %v836 = vmul.f32 %v831, %v835
        %v837 = vpack.c.bf16 %v836, %v836
        %v839 = vsel %vm805, %v785, 0
        %v842 = vsel %vm805, %v837, 0
        %844 = vmatpush.bf16.xpose.msra.mxu0 0
        %845 = vmatpush.bf16.xpose.msra.mxu0 0
        %846 = vmatpush.bf16.xpose.msra.mxu0 0
        %847 = vmatpush.bf16.xpose.msra.mxu0 0
        %848 = vmatpush.bf16.xpose.msra.mxu0 0
        %849 = vmatpush.bf16.xpose.msra.mxu0 0
        %850 = vmatpush.bf16.xpose.msra.mxu0 0
        %851 = vmatpush.bf16.xpose.msra.mxu0 %v842
        %852 = vmatmul.bf16.gmra.mxu0 %v839
        %v853 = vpop.f32.mrf.mxu0
        %v854 = vadd.f32 0.0, %v853
        %v855 = vpop.f32.mrf.mxu0
        %856 = vdwg.mxu0
        %857 = vxpose.xlu0.c.b16.start [1/8] %v778, 128
        %858 = vxpose.xlu0.c.b16.cont [2/8] 0, 128
        %859 = vxpose.xlu0.c.b16.cont [3/8] 0, 128
        %860 = vxpose.xlu0.c.b16.cont [4/8] 0, 128
        %861 = vxpose.xlu0.c.b16.cont [5/8] 0, 128
        %862 = vxpose.xlu0.c.b16.cont [6/8] 0, 128
        %863 = vxpose.xlu0.c.b16.cont [7/8] 0, 128
        %864 = vxpose.xlu0.c.b16.end [8/8] 0, 128
        %v865 = vpop.trf.xlu0
        %v866 = vpop.trf.xlu0
        %v867 = vpop.trf.xlu0
        %v868 = vpop.trf.xlu0
        %v869 = vpop.trf.xlu0
        %v870 = vpop.trf.xlu0
        %v871 = vpop.trf.xlu0
        %v872 = vpop.trf.xlu0
        %v874 = vsel %vm805, %v865, 0
        %v877 = vsel %vm809, %v782, 0
        %879 = vmatpush.bf16.msra.mxu0 0
        %880 = vmatpush.bf16.msra.mxu0 0
        %881 = vmatpush.bf16.msra.mxu0 0
        %882 = vmatpush.bf16.msra.mxu0 0
        %883 = vmatpush.bf16.msra.mxu0 0
        %884 = vmatpush.bf16.msra.mxu0 0
        %885 = vmatpush.bf16.msra.mxu0 0
        %886 = vmatpush.bf16.msra.mxu0 %v877
        %887 = vmatmul.bf16.gmra.mxu0 %v874
        %v888 = vpop.f32.mrf.mxu0
        %v889 = vadd.f32 0.0, %v888
        %v890 = vpop.f32.mrf.mxu0
        %891 = vdwg.mxu0
        %v892 = vsel %vm805, %v889, -inf
        %893 = vmax.xlane.f32.xlu0 %v892
        %v894 = vpop.xlane.xlu0 %893
        %v895 = vsub.f32 %v889, %v894
        %v896 = vmul.f32 %v895, 1.442695
        %v897 = vpow.pop %v896
        %v898 = vsel %vm805, %v897, 0.0
        %899 = vadd.xlane.f32.xlu0 %v898
        %v900 = vpop.xlane.xlu0 %899
        %v901 = vrcp.pop %v900
        %v902 = vmul.f32 %v897, %v901
        %v903 = vpack.c.bf16 %v902, %v902
        %v905 = vsel %vm805, %v786, 0
        %v908 = vsel %vm805, %v903, 0
        %910 = vmatpush.bf16.xpose.msra.mxu0 0
        %911 = vmatpush.bf16.xpose.msra.mxu0 0
        %912 = vmatpush.bf16.xpose.msra.mxu0 0
        %913 = vmatpush.bf16.xpose.msra.mxu0 0
        %914 = vmatpush.bf16.xpose.msra.mxu0 0
        %915 = vmatpush.bf16.xpose.msra.mxu0 0
        %916 = vmatpush.bf16.xpose.msra.mxu0 0
        %917 = vmatpush.bf16.xpose.msra.mxu0 %v908
        %918 = vmatmul.bf16.gmra.mxu0 %v905
        %v919 = vpop.f32.mrf.mxu0
        %v920 = vadd.f32 0.0, %v919
        %v921 = vpop.f32.mrf.mxu0
        %922 = vdwg.mxu0
        %923 = vxpose.xlu0.c.b16.start [1/8] %v779, 128
        %924 = vxpose.xlu0.c.b16.cont [2/8] 0, 128
        %925 = vxpose.xlu0.c.b16.cont [3/8] 0, 128
        %926 = vxpose.xlu0.c.b16.cont [4/8] 0, 128
        %927 = vxpose.xlu0.c.b16.cont [5/8] 0, 128
        %928 = vxpose.xlu0.c.b16.cont [6/8] 0, 128
        %929 = vxpose.xlu0.c.b16.cont [7/8] 0, 128
        %930 = vxpose.xlu0.c.b16.end [8/8] 0, 128
        %v931 = vpop.trf.xlu0
        %v932 = vpop.trf.xlu0
        %v933 = vpop.trf.xlu0
        %v934 = vpop.trf.xlu0
        %v935 = vpop.trf.xlu0
        %v936 = vpop.trf.xlu0
        %v937 = vpop.trf.xlu0
        %v938 = vpop.trf.xlu0
        %v940 = vsel %vm805, %v931, 0
        %v943 = vsel %vm809, %v783, 0
        %945 = vmatpush.bf16.msra.mxu0 0
        %946 = vmatpush.bf16.msra.mxu0 0
        %947 = vmatpush.bf16.msra.mxu0 0
        %948 = vmatpush.bf16.msra.mxu0 0
        %949 = vmatpush.bf16.msra.mxu0 0
        %950 = vmatpush.bf16.msra.mxu0 0
        %951 = vmatpush.bf16.msra.mxu0 0
        %952 = vmatpush.bf16.msra.mxu0 %v943
        %953 = vmatmul.bf16.gmra.mxu0 %v940
        %v954 = vpop.f32.mrf.mxu0
        %v955 = vadd.f32 0.0, %v954
        %v956 = vpop.f32.mrf.mxu0
        %957 = vdwg.mxu0
        %v958 = vsel %vm805, %v955, -inf
        %959 = vmax.xlane.f32.xlu0 %v958
        %v960 = vpop.xlane.xlu0 %959
        %v961 = vsub.f32 %v955, %v960
        %v962 = vmul.f32 %v961, 1.442695
        %v963 = vpow.pop %v962
        %v964 = vsel %vm805, %v963, 0.0
        %965 = vadd.xlane.f32.xlu0 %v964
        %v966 = vpop.xlane.xlu0 %965
        %v967 = vrcp.pop %v966
        %v968 = vmul.f32 %v963, %v967
        %v969 = vpack.c.bf16 %v968, %v968
        %v971 = vsel %vm805, %v787, 0
        %v974 = vsel %vm805, %v969, 0
        %976 = vmatpush.bf16.xpose.msra.mxu0 0
        %977 = vmatpush.bf16.xpose.msra.mxu0 0
        %978 = vmatpush.bf16.xpose.msra.mxu0 0
        %979 = vmatpush.bf16.xpose.msra.mxu0 0
        %980 = vmatpush.bf16.xpose.msra.mxu0 0
        %981 = vmatpush.bf16.xpose.msra.mxu0 0
        %982 = vmatpush.bf16.xpose.msra.mxu0 0
        %983 = vmatpush.bf16.xpose.msra.mxu0 %v974
        %984 = vmatmul.bf16.gmra.mxu0 %v971
        %v985 = vpop.f32.mrf.mxu0
        %v986 = vadd.f32 0.0, %v985
        %v987 = vpop.f32.mrf.mxu0
        %988 = vdwg.mxu0
        %989 = vxpose.xlu0.c.b16.start [1/8] %v780, 128
        %990 = vxpose.xlu0.c.b16.cont [2/8] 0, 128
        %991 = vxpose.xlu0.c.b16.cont [3/8] 0, 128
        %992 = vxpose.xlu0.c.b16.cont [4/8] 0, 128
        %993 = vxpose.xlu0.c.b16.cont [5/8] 0, 128
        %994 = vxpose.xlu0.c.b16.cont [6/8] 0, 128
        %995 = vxpose.xlu0.c.b16.cont [7/8] 0, 128
        %996 = vxpose.xlu0.c.b16.end [8/8] 0, 128
        %v997 = vpop.trf.xlu0
        %v998 = vpop.trf.xlu0
        %v999 = vpop.trf.xlu0
        %v1000 = vpop.trf.xlu0
        %v1001 = vpop.trf.xlu0
        %v1002 = vpop.trf.xlu0
        %v1003 = vpop.trf.xlu0
        %v1004 = vpop.trf.xlu0
        %v1006 = vsel %vm805, %v997, 0
        %v1009 = vsel %vm809, %v784, 0
        %1011 = vmatpush.bf16.msra.mxu0 0
        %1012 = vmatpush.bf16.msra.mxu0 0
        %1013 = vmatpush.bf16.msra.mxu0 0
        %1014 = vmatpush.bf16.msra.mxu0 0
        %1015 = vmatpush.bf16.msra.mxu0 0
        %1016 = vmatpush.bf16.msra.mxu0 0
        %1017 = vmatpush.bf16.msra.mxu0 0
        %1018 = vmatpush.bf16.msra.mxu0 %v1009
        %1019 = vmatmul.bf16.gmra.mxu0 %v1006
        %v1020 = vpop.f32.mrf.mxu0
        %v1021 = vadd.f32 0.0, %v1020
        %v1022 = vpop.f32.mrf.mxu0
        %1023 = vdwg.mxu0
        %v1024 = vsel %vm805, %v1021, -inf
        %1025 = vmax.xlane.f32.xlu0 %v1024
        %v1026 = vpop.xlane.xlu0 %1025
        %v1027 = vsub.f32 %v1021, %v1026
        %v1028 = vmul.f32 %v1027, 1.442695
        %v1029 = vpow.pop %v1028
        %v1030 = vsel %vm805, %v1029, 0.0
        %1031 = vadd.xlane.f32.xlu0 %v1030
        %v1032 = vpop.xlane.xlu0 %1031
        %v1033 = vrcp.pop %v1032
        %v1034 = vmul.f32 %v1029, %v1033
        %v1035 = vpack.c.bf16 %v1034, %v1034
        %v1037 = vsel %vm805, %v788, 0
        %v1040 = vsel %vm805, %v1035, 0
        %1042 = vmatpush.bf16.xpose.msra.mxu0 0
        %1043 = vmatpush.bf16.xpose.msra.mxu0 0
        %1044 = vmatpush.bf16.xpose.msra.mxu0 0
        %1045 = vmatpush.bf16.xpose.msra.mxu0 0
        %1046 = vmatpush.bf16.xpose.msra.mxu0 0
        %1047 = vmatpush.bf16.xpose.msra.mxu0 0
        %1048 = vmatpush.bf16.xpose.msra.mxu0 0
        %1049 = vmatpush.bf16.xpose.msra.mxu0 %v1040
        %1050 = vmatmul.bf16.gmra.mxu0 %v1037
        %v1051 = vpop.f32.mrf.mxu0
        %v1052 = vadd.f32 0.0, %v1051
        %v1053 = vpop.f32.mrf.mxu0
        %1054 = vdwg.mxu0
        %v1055 = vpack.c.bf16 %v920, %v854
        %v1056 = vpack.c.bf16 %v1052, %v986
        %v1057 = vld [vmem:[%s7] sm:$0xf]
        %v1058 = vld [vmem:[%s7 + $0x4] sm:$0xf]
        %v1059 = vld [vmem:[%s7 + $0x8] sm:$0xf]
        %v1060 = vld [vmem:[%s7 + $0xc] sm:$0xf]
        %1061 = vxpose.xlu0.c.b16.start [1/8] %v1055, 128
        %1062 = vxpose.xlu0.c.b16.cont [2/8] %v1056, 128
        %1063 = vxpose.xlu0.c.b16.cont [3/8] 0, 128
        %1064 = vxpose.xlu0.c.b16.cont [4/8] 0, 128
        %1065 = vxpose.xlu0.c.b16.cont [5/8] 0, 128
        %1066 = vxpose.xlu0.c.b16.cont [6/8] 0, 128
        %1067 = vxpose.xlu0.c.b16.cont [7/8] 0, 128
        %1068 = vxpose.xlu0.c.b16.end [8/8] 0, 128
        %v1069 = vpop.trf.xlu0
        %v1070 = vpop.trf.xlu0
        %v1071 = vpop.trf.xlu0
        %v1072 = vpop.trf.xlu0
        %v1073 = vpop.trf.xlu0
        %v1074 = vpop.trf.xlu0
        %v1075 = vpop.trf.xlu0
        %v1076 = vpop.trf.xlu0
        %v1081 = vunpack.c.l.b16 %v1057
        %v1082 = vunpack.c.l.b16 %v1058
        %v1083 = vunpack.c.l.b16 %v1059
        %v1084 = vunpack.c.l.b16 %v1060
        %v1085 = vpack.c.b16 %v1082, %v1081
        %v1086 = vpack.c.b16 %v1084, %v1083
        %v1090 = vsel %vm561, %v1069, 0
        %1092 = vmatpush.bf16.msra.mxu0 0
        %1093 = vmatpush.bf16.msra.mxu0 0
        %1094 = vmatpush.bf16.msra.mxu0 0
        %1095 = vmatpush.bf16.msra.mxu0 0
        %1096 = vmatpush.bf16.msra.mxu0 0
        %1097 = vmatpush.bf16.msra.mxu0 0
        %1098 = vmatpush.bf16.msra.mxu0 %v1086
        %1099 = vmatpush.bf16.msra.mxu0 %v1085
        %1100 = vmatmul.bf16.gmra.mxu0 %v1090
        %v1101 = vpop.f32.mrf.mxu0
        %v1102 = vadd.f32 0.0, %v1101
        %v1103 = vpop.f32.mrf.mxu0
        %1104 = vdwg.mxu0
        %v1105 = vadd.f32 %v558, %v1102
        %v1106 = vperm.slane %v383, 4
        %v1107 = vadd.f32 %v1105, %v1106
        %v1108 = vsel %vm561, %v1107, 0.0
        %1109 = vadd.xlane.f32.xlu0 %v1108
        %v1110 = vpop.xlane.xlu0 %1109
        %v1111 = vmul.f32 %v1110, %v571
        %v1112 = vmul.f32 %v1107, %v1107
        %v1113 = vsel %vm561, %v1112, 0.0
        %1114 = vadd.xlane.f32.xlu0 %v1113
        %v1115 = vpop.xlane.xlu0 %1114
        %v1116 = vmul.f32 %v1115, %v571
        %v1117 = vmul.f32 %v1111, %v1111
        %v1118 = vsub.f32 %v1116, %v1117
        %v1119 = vmax.f32 %v1118, 0.0
        %v1120 = vsub.f32 %v1107, %v1111
        %v1121 = vadd.f32 %v1119, 1e-05
        %v1122 = vrsqrt.pop %v1121
        %v1123 = vmul.f32 %v1122, %v1121
        %v1124 = vmul.f32 %v1123, %v1122
        %v1125 = vmul.f32 0.5, %v1124
        %v1126 = vsub.f32 1.5, %v1125
        %v1127 = vmul.f32 %v1122, %v1126
        %vm1128 = vweird.f32 %v1121
        %vm1129 = vweird.f32 %v1122
        %vm1130 = vmor %vm1128, %vm1129
        %v1131 = vsel %vm1130, %v1122, %v1127
        %v1132 = vmul.f32 %v1120, %v1131
        %v1133 = vperm.slane %v383, 2
        %v1134 = vmul.f32 %v1132, %v1133
        %v1135 = vperm.slane %v383, 3
        %v1136 = vadd.f32 %v1134, %v1135
        %v1137 = vpack.c.bf16 %v1136, %v1136
        %v1138 = vld [vmem:[%s8] sm:$0xf]
        %v1139 = vld [vmem:[%s8 + $0x4] sm:$0xf]
        %v1140 = vld [vmem:[%s8 + $0x8] sm:$0xf]
        %v1141 = vld [vmem:[%s8 + $0xc] sm:$0xf]
        %v1142 = vld [vmem:[%s5] sm:$0x1]
        %v1144 = vperm.slane %v1142, 0
        %v1150 = vunpack.c.l.b16 %v1138
        %v1151 = vunpack.c.l.b16 %v1139
        %v1152 = vunpack.c.l.b16 %v1140
        %v1153 = vunpack.c.l.b16 %v1141
        %v1154 = vpack.c.b16 %v1151, %v1150
        %v1155 = vpack.c.b16 %v1153, %v1152
        %v1159 = vsel %vm561, %v1137, 0
        %1161 = vmatpush.bf16.msra.mxu0 0
        %1162 = vmatpush.bf16.msra.mxu0 0
        %1163 = vmatpush.bf16.msra.mxu0 0
        %1164 = vmatpush.bf16.msra.mxu0 0
        %1165 = vmatpush.bf16.msra.mxu0 0
        %1166 = vmatpush.bf16.msra.mxu0 0
        %1167 = vmatpush.bf16.msra.mxu0 %v1155
        %1168 = vmatpush.bf16.msra.mxu0 %v1154
        %1169 = vmatmul.bf16.gmra.mxu0 %v1159
        %v1170 = vpop.f32.mrf.mxu0
        %v1171 = vadd.f32 %v1144, %v1170
        %v1172 = vpop.f32.mrf.mxu0
        %1173 = vdwg.mxu0
        %v1174 = vmul.f32 %v1171, 0.70710677
        %v1175 = vand.u32 2147483647, %v1174
        %v1176 = vmul.f32 %v1175, 0.3275911
        %v1177 = vadd.f32 %v1176, 1.0
        %v1178 = vrcp.pop %v1177
        %v1179 = vmul.f32 %v1177, %v1178
        %v1180 = vsub.f32 1.0, %v1179
        %v1181 = vmul.f32 %v1178, %v1180
        %v1182 = vadd.f32 %v1178, %v1181
        %vm1183 = vweird.f32 %v1177
        %vm1184 = vweird.f32 %v1178
        %vm1185 = vmor %vm1183, %vm1184
        %v1186 = vsel %vm1185, %v1178, %v1182
        %v1187 = vand.u32 2147483647, %v1177
        %vm1188 = vcmp.eq.f32.partialorder %v1187, 8.507059e+37
        %v1189 = vand.u32 %v1177, 2147483648
        %v1190 = vor.u32 1.1754944e-38, %v1189
        %v1191 = vsel %vm1188, %v1190, %v1186
        %v1192 = vmul.f32 1.0, %v1191
        %v1193 = vmul.f32 %v1192, 1.0614054
        %v1194 = vsub.f32 %v1193, 1.4531521
        %v1195 = vmul.f32 %v1194, %v1192
        %v1196 = vadd.f32 %v1195, 1.4214138
        %v1197 = vmul.f32 %v1196, %v1192
        %v1198 = vsub.f32 %v1197, 0.28449672
        %v1199 = vmul.f32 %v1198, %v1192
        %v1200 = vadd.f32 %v1199, 0.2548296
        %v1201 = vmul.f32 %v1200, %v1192
        %v1202 = vsub.f32 0.0, %v1175
        %v1203 = vmul.f32 %v1202, %v1175
        %v1204 = vmul.f32 %v1203, 1.442695
        %v1205 = vpow.pop %v1204
        %v1206 = vmul.f32 %v1201, %v1205
        %v1207 = vsub.f32 1.0, %v1206
        %vm1208 = vcmp.ge.f32.partialorder %v1174, 0.0
        %v1209 = vsub.f32 0.0, %v1207
        %v1210 = vsel %vm1208, %v1207, %v1209
        %v1211 = vmul.f32 %v1171, 0.5
        %v1212 = vadd.f32 %v1210, 1.0
        %v1213 = vmul.f32 %v1211, %v1212
        %v1214 = vpack.c.bf16 %v1213, %v1213
        %v1215 = vld [vmem:[%s9] sm:$0xf]
        %v1216 = vld [vmem:[%s9 + $0x4] sm:$0xf]
        %v1217 = vld [vmem:[%s9 + $0x8] sm:$0xf]
        %v1218 = vld [vmem:[%s9 + $0xc] sm:$0xf]
        %v1219 = vld [vmem:[%s9 + $0x10] sm:$0xf]
        %v1220 = vld [vmem:[%s9 + $0x14] sm:$0xf]
        %v1221 = vld [vmem:[%s9 + $0x18] sm:$0xf]
        %v1222 = vld [vmem:[%s9 + $0x1c] sm:$0xf]
        %v1223 = vld [vmem:[%s9 + $0x20] sm:$0xf]
        %v1224 = vld [vmem:[%s9 + $0x24] sm:$0xf]
        %v1225 = vld [vmem:[%s9 + $0x28] sm:$0xf]
        %v1226 = vld [vmem:[%s9 + $0x2c] sm:$0xf]
        %v1227 = vld [vmem:[%s9 + $0x30] sm:$0xf]
        %v1228 = vld [vmem:[%s9 + $0x34] sm:$0xf]
        %v1229 = vld [vmem:[%s9 + $0x38] sm:$0xf]
        %v1230 = vld [vmem:[%s9 + $0x3c] sm:$0xf]
        %v1247 = vunpack.c.l.b16 %v1215
        %v1248 = vunpack.c.l.b16 %v1216
        %v1249 = vunpack.c.l.b16 %v1217
        %v1250 = vunpack.c.l.b16 %v1218
        %v1251 = vunpack.c.l.b16 %v1219
        %v1252 = vunpack.c.l.b16 %v1220
        %v1253 = vunpack.c.l.b16 %v1221
        %v1254 = vunpack.c.l.b16 %v1222
        %v1255 = vunpack.c.l.b16 %v1223
        %v1256 = vunpack.c.l.b16 %v1224
        %v1257 = vunpack.c.l.b16 %v1225
        %v1258 = vunpack.c.l.b16 %v1226
        %v1259 = vunpack.c.l.b16 %v1227
        %v1260 = vunpack.c.l.b16 %v1228
        %v1261 = vunpack.c.l.b16 %v1229
        %v1262 = vunpack.c.l.b16 %v1230
        %v1263 = vpack.c.b16 %v1248, %v1247
        %v1264 = vpack.c.b16 %v1250, %v1249
        %v1265 = vpack.c.b16 %v1252, %v1251
        %v1266 = vpack.c.b16 %v1254, %v1253
        %v1267 = vpack.c.b16 %v1256, %v1255
        %v1268 = vpack.c.b16 %v1258, %v1257
        %v1269 = vpack.c.b16 %v1260, %v1259
        %v1270 = vpack.c.b16 %v1262, %v1261
        %1279 = vmatpush.bf16.msra.mxu0 %v1270
        %1280 = vmatpush.bf16.msra.mxu0 %v1269
        %1281 = vmatpush.bf16.msra.mxu0 %v1268
        %1282 = vmatpush.bf16.msra.mxu0 %v1267
        %1283 = vmatpush.bf16.msra.mxu0 %v1266
        %1284 = vmatpush.bf16.msra.mxu0 %v1265
        %1285 = vmatpush.bf16.msra.mxu0 %v1264
        %1286 = vmatpush.bf16.msra.mxu0 %v1263
        %1287 = vmatmul.bf16.gmra.mxu0 %v1214
        %v1288 = vpop.f32.mrf.mxu0
        %v1289 = vadd.f32 0.0, %v1288
        %v1290 = vpop.f32.mrf.mxu0
        %1291 = vdwg.mxu0
        %v1292 = vadd.f32 %v1107, %v1289
        %v1293 = vperm.slane %v383, 5
        %v1294 = vadd.f32 %v1292, %v1293
        %v1295 = vsel %vm561, %v1294, 0.0
        %1296 = vadd.xlane.f32.xlu0 %v1295
        %v1297 = vpop.xlane.xlu0 %1296
        %v1298 = vmul.f32 %v1297, %v571
        %v1299 = vmul.f32 %v1294, %v1294
        %v1300 = vsel %vm561, %v1299, 0.0
        %1301 = vadd.xlane.f32.xlu0 %v1300
        %v1302 = vpop.xlane.xlu0 %1301
        %v1303 = vmul.f32 %v1302, %v571
        %v1304 = vmul.f32 %v1298, %v1298
        %v1305 = vsub.f32 %v1303, %v1304
        %v1306 = vmax.f32 %v1305, 0.0
        %v1307 = vsub.f32 %v1294, %v1298
        %v1308 = vadd.f32 %v1306, 1e-05
        %v1309 = vrsqrt.pop %v1308
        %v1310 = vmul.f32 %v1309, %v1308
        %v1311 = vmul.f32 %v1310, %v1309
        %v1312 = vmul.f32 0.5, %v1311
        %v1313 = vsub.f32 1.5, %v1312
        %v1314 = vmul.f32 %v1309, %v1313
        %vm1315 = vweird.f32 %v1308
        %vm1316 = vweird.f32 %v1309
        %vm1317 = vmor %vm1315, %vm1316
        %v1318 = vsel %vm1317, %v1309, %v1314
        %v1319 = vmul.f32 %v1307, %v1318
        %v1320 = vperm.slane %v384, 0
        %v1321 = vmul.f32 %v1319, %v1320
        %v1322 = vperm.slane %v384, 1
        %v1323 = vadd.f32 %v1321, %v1322
        %v1324 = vpack.c.bf16 %v1323, %v1323
        %s1325 = scalar_lea.vmem %s6, 48
        %v1326 = vld [vmem:[%s1325] sm:$0xf]
        %v1327 = vld [vmem:[%s1325 + $0x4] sm:$0xf]
        %v1328 = vld [vmem:[%s1325 + $0x8] sm:$0xf]
        %v1329 = vld [vmem:[%s1325 + $0xc] sm:$0xf]
        %v1330 = vld [vmem:[%s1325 + $0x10] sm:$0xf]
        %v1331 = vld [vmem:[%s1325 + $0x14] sm:$0xf]
        %v1332 = vld [vmem:[%s1325 + $0x18] sm:$0xf]
        %v1333 = vld [vmem:[%s1325 + $0x1c] sm:$0xf]
        %v1334 = vld [vmem:[%s1325 + $0x20] sm:$0xf]
        %v1335 = vld [vmem:[%s1325 + $0x24] sm:$0xf]
        %v1336 = vld [vmem:[%s1325 + $0x28] sm:$0xf]
        %v1337 = vld [vmem:[%s1325 + $0x2c] sm:$0xf]
        %s1338 = scalar_lea.vmem %s4, 96
        %v1339 = vld [vmem:[%s1338] sm:$0xff]
        %v1340 = vld [vmem:[%s1338 + $0x8] sm:$0xff]
        %v1341 = vld [vmem:[%s1338 + $0x10] sm:$0xff]
        %v1342 = vld [vmem:[%s1338 + $0x18] sm:$0xff]
        %v1343 = vld [vmem:[%s1338 + $0x20] sm:$0xff]
        %v1344 = vld [vmem:[%s1338 + $0x28] sm:$0xff]
        %v1345 = vld [vmem:[%s1338 + $0x30] sm:$0xff]
        %v1346 = vld [vmem:[%s1338 + $0x38] sm:$0xff]
        %v1347 = vld [vmem:[%s1338 + $0x40] sm:$0xff]
        %v1348 = vld [vmem:[%s1338 + $0x48] sm:$0xff]
        %v1349 = vld [vmem:[%s1338 + $0x50] sm:$0xff]
        %v1350 = vld [vmem:[%s1338 + $0x58] sm:$0xff]
        %1352 = vset.pattern.permute.xlu0 0
        %1353 = vperm.xlu0 %1352, %v1339
        %v1354 = vpop.permute.xlu0 %1353
        %1357 = vset.pattern.permute.xlu0 0
        %1358 = vperm.xlu0 %1357, %v1340
        %v1359 = vpop.permute.xlu0 %1358
        %1362 = vset.pattern.permute.xlu0 0
        %1363 = vperm.xlu0 %1362, %v1341
        %v1364 = vpop.permute.xlu0 %1363
        %1367 = vset.pattern.permute.xlu0 0
        %1368 = vperm.xlu0 %1367, %v1342
        %v1369 = vpop.permute.xlu0 %1368
        %1372 = vset.pattern.permute.xlu0 0
        %1373 = vperm.xlu0 %1372, %v1343
        %v1374 = vpop.permute.xlu0 %1373
        %1377 = vset.pattern.permute.xlu0 0
        %1378 = vperm.xlu0 %1377, %v1344
        %v1379 = vpop.permute.xlu0 %1378
        %1382 = vset.pattern.permute.xlu0 0
        %1383 = vperm.xlu0 %1382, %v1345
        %v1384 = vpop.permute.xlu0 %1383
        %1387 = vset.pattern.permute.xlu0 0
        %1388 = vperm.xlu0 %1387, %v1346
        %v1389 = vpop.permute.xlu0 %1388
        %1392 = vset.pattern.permute.xlu0 0
        %1393 = vperm.xlu0 %1392, %v1347
        %v1394 = vpop.permute.xlu0 %1393
        %1397 = vset.pattern.permute.xlu0 0
        %1398 = vperm.xlu0 %1397, %v1348
        %v1399 = vpop.permute.xlu0 %1398
        %1402 = vset.pattern.permute.xlu0 0
        %1403 = vperm.xlu0 %1402, %v1349
        %v1404 = vpop.permute.xlu0 %1403
        %1407 = vset.pattern.permute.xlu0 0
        %1408 = vperm.xlu0 %1407, %v1350
        %v1409 = vpop.permute.xlu0 %1408
        %v1423 = vunpack.c.l.b16 %v1326
        %v1424 = vunpack.c.l.b16 %v1327
        %v1425 = vunpack.c.l.b16 %v1328
        %v1426 = vunpack.c.l.b16 %v1329
        %v1427 = vunpack.c.l.b16 %v1330
        %v1428 = vunpack.c.l.b16 %v1331
        %v1429 = vunpack.c.l.b16 %v1332
        %v1430 = vunpack.c.l.b16 %v1333
        %v1431 = vunpack.c.l.b16 %v1334
        %v1432 = vunpack.c.l.b16 %v1335
        %v1433 = vunpack.c.l.b16 %v1336
        %v1434 = vunpack.c.l.b16 %v1337
        %v1435 = vpack.c.b16 %v1424, %v1423
        %v1436 = vpack.c.b16 %v1426, %v1425
        %v1437 = vpack.c.b16 %v1428, %v1427
        %v1438 = vpack.c.b16 %v1430, %v1429
        %v1439 = vpack.c.b16 %v1432, %v1431
        %v1440 = vpack.c.b16 %v1434, %v1433
        %v1442 = vsel %vm561, %v1435, 0
        %v1445 = vsel %vm561, %v1436, 0
        %v1448 = vsel %vm561, %v1437, 0
        %v1451 = vsel %vm561, %v1438, 0
        %v1454 = vsel %vm561, %v1439, 0
        %v1457 = vsel %vm561, %v1440, 0
        %v1460 = vsel %vm561, %v1324, 0
        %1462 = vmatpush.bf16.xpose.msra.mxu0 0
        %1463 = vmatpush.bf16.xpose.msra.mxu0 0
        %1464 = vmatpush.bf16.xpose.msra.mxu0 0
        %1465 = vmatpush.bf16.xpose.msra.mxu0 0
        %1466 = vmatpush.bf16.xpose.msra.mxu0 0
        %1467 = vmatpush.bf16.xpose.msra.mxu0 0
        %1468 = vmatpush.bf16.xpose.msra.mxu0 0
        %1469 = vmatpush.bf16.xpose.msra.mxu0 %v1460
        %1470 = vmatmul.bf16.gmra.mxu0 %v1442
        %v1471 = vpop.f32.mrf.mxu0
        %v1472 = vadd.f32 %v1354, %v1471
        %v1473 = vpop.f32.mrf.mxu0
        %v1474 = vadd.f32 %v1359, %v1473
        %1475 = vmatmul.bf16.gmra.mxu0 %v1445
        %v1476 = vpop.f32.mrf.mxu0
        %v1477 = vadd.f32 %v1364, %v1476
        %v1478 = vpop.f32.mrf.mxu0
        %v1479 = vadd.f32 %v1369, %v1478
        %1480 = vmatmul.bf16.gmra.mxu0 %v1448
        %v1481 = vpop.f32.mrf.mxu0
        %v1482 = vadd.f32 %v1374, %v1481
        %v1483 = vpop.f32.mrf.mxu0
        %v1484 = vadd.f32 %v1379, %v1483
        %1485 = vmatmul.bf16.gmra.mxu0 %v1451
        %v1486 = vpop.f32.mrf.mxu0
        %v1487 = vadd.f32 %v1384, %v1486
        %v1488 = vpop.f32.mrf.mxu0
        %v1489 = vadd.f32 %v1389, %v1488
        %1490 = vmatmul.bf16.gmra.mxu0 %v1454
        %v1491 = vpop.f32.mrf.mxu0
        %v1492 = vadd.f32 %v1394, %v1491
        %v1493 = vpop.f32.mrf.mxu0
        %v1494 = vadd.f32 %v1399, %v1493
        %1495 = vmatmul.bf16.gmra.mxu0 %v1457
        %v1496 = vpop.f32.mrf.mxu0
        %v1497 = vadd.f32 %v1404, %v1496
        %v1498 = vpop.f32.mrf.mxu0
        %v1499 = vadd.f32 %v1409, %v1498
        %1500 = vdwg.mxu0
        %v1501 = vmul.f32 %v1472, 0.35355338
        %v1502 = vmul.f32 %v1474, 0.35355338
        %v1503 = vmul.f32 %v1477, 0.35355338
        %v1504 = vmul.f32 %v1479, 0.35355338
        %v1505 = vpack.c.bf16 %v1501, %v1501
        %v1506 = vpack.c.bf16 %v1502, %v1502
        %v1507 = vpack.c.bf16 %v1503, %v1503
        %v1508 = vpack.c.bf16 %v1504, %v1504
        %v1509 = vpack.c.bf16 %v1482, %v1482
        %v1510 = vpack.c.bf16 %v1484, %v1484
        %v1511 = vpack.c.bf16 %v1487, %v1487
        %v1512 = vpack.c.bf16 %v1489, %v1489
        %v1513 = vpack.c.bf16 %v1492, %v1492
        %v1514 = vpack.c.bf16 %v1494, %v1494
        %v1515 = vpack.c.bf16 %v1497, %v1497
        %v1516 = vpack.c.bf16 %v1499, %v1499
        %1517 = vxpose.xlu0.c.b16.start [1/8] %v1505, 128
        %1518 = vxpose.xlu0.c.b16.cont [2/8] 0, 128
        %1519 = vxpose.xlu0.c.b16.cont [3/8] 0, 128
        %1520 = vxpose.xlu0.c.b16.cont [4/8] 0, 128
        %1521 = vxpose.xlu0.c.b16.cont [5/8] 0, 128
        %1522 = vxpose.xlu0.c.b16.cont [6/8] 0, 128
        %1523 = vxpose.xlu0.c.b16.cont [7/8] 0, 128
        %1524 = vxpose.xlu0.c.b16.end [8/8] 0, 128
        %v1525 = vpop.trf.xlu0
        %v1526 = vpop.trf.xlu0
        %v1527 = vpop.trf.xlu0
        %v1528 = vpop.trf.xlu0
        %v1529 = vpop.trf.xlu0
        %v1530 = vpop.trf.xlu0
        %v1531 = vpop.trf.xlu0
        %v1532 = vpop.trf.xlu0
        %v1534 = vsel %vm805, %v1525, 0
        %v1537 = vsel %vm809, %v1509, 0
        %1539 = vmatpush.bf16.msra.mxu0 0
        %1540 = vmatpush.bf16.msra.mxu0 0
        %1541 = vmatpush.bf16.msra.mxu0 0
        %1542 = vmatpush.bf16.msra.mxu0 0
        %1543 = vmatpush.bf16.msra.mxu0 0
        %1544 = vmatpush.bf16.msra.mxu0 0
        %1545 = vmatpush.bf16.msra.mxu0 0
        %1546 = vmatpush.bf16.msra.mxu0 %v1537
        %1547 = vmatmul.bf16.gmra.mxu0 %v1534
        %v1548 = vpop.f32.mrf.mxu0
        %v1549 = vadd.f32 0.0, %v1548
        %v1550 = vpop.f32.mrf.mxu0
        %1551 = vdwg.mxu0
        %v1552 = vsel %vm805, %v1549, -inf
        %1553 = vmax.xlane.f32.xlu0 %v1552
        %v1554 = vpop.xlane.xlu0 %1553
        %v1555 = vsub.f32 %v1549, %v1554
        %v1556 = vmul.f32 %v1555, 1.442695
        %v1557 = vpow.pop %v1556
        %v1558 = vsel %vm805, %v1557, 0.0
        %1559 = vadd.xlane.f32.xlu0 %v1558
        %v1560 = vpop.xlane.xlu0 %1559
        %v1561 = vrcp.pop %v1560
        %v1562 = vmul.f32 %v1557, %v1561
        %v1563 = vpack.c.bf16 %v1562, %v1562
        %v1565 = vsel %vm805, %v1513, 0
        %v1568 = vsel %vm805, %v1563, 0
        %1570 = vmatpush.bf16.xpose.msra.mxu0 0
        %1571 = vmatpush.bf16.xpose.msra.mxu0 0
        %1572 = vmatpush.bf16.xpose.msra.mxu0 0
        %1573 = vmatpush.bf16.xpose.msra.mxu0 0
        %1574 = vmatpush.bf16.xpose.msra.mxu0 0
        %1575 = vmatpush.bf16.xpose.msra.mxu0 0
        %1576 = vmatpush.bf16.xpose.msra.mxu0 0
        %1577 = vmatpush.bf16.xpose.msra.mxu0 %v1568
        %1578 = vmatmul.bf16.gmra.mxu0 %v1565
        %v1579 = vpop.f32.mrf.mxu0
        %v1580 = vadd.f32 0.0, %v1579
        %v1581 = vpop.f32.mrf.mxu0
        %1582 = vdwg.mxu0
        %1583 = vxpose.xlu0.c.b16.start [1/8] %v1506, 128
        %1584 = vxpose.xlu0.c.b16.cont [2/8] 0, 128
        %1585 = vxpose.xlu0.c.b16.cont [3/8] 0, 128
        %1586 = vxpose.xlu0.c.b16.cont [4/8] 0, 128
        %1587 = vxpose.xlu0.c.b16.cont [5/8] 0, 128
        %1588 = vxpose.xlu0.c.b16.cont [6/8] 0, 128
        %1589 = vxpose.xlu0.c.b16.cont [7/8] 0, 128
        %1590 = vxpose.xlu0.c.b16.end [8/8] 0, 128
        %v1591 = vpop.trf.xlu0
        %v1592 = vpop.trf.xlu0
        %v1593 = vpop.trf.xlu0
        %v1594 = vpop.trf.xlu0
        %v1595 = vpop.trf.xlu0
        %v1596 = vpop.trf.xlu0
        %v1597 = vpop.trf.xlu0
        %v1598 = vpop.trf.xlu0
        %v1600 = vsel %vm805, %v1591, 0
        %v1603 = vsel %vm809, %v1510, 0
        %1605 = vmatpush.bf16.msra.mxu0 0
        %1606 = vmatpush.bf16.msra.mxu0 0
        %1607 = vmatpush.bf16.msra.mxu0 0
        %1608 = vmatpush.bf16.msra.mxu0 0
        %1609 = vmatpush.bf16.msra.mxu0 0
        %1610 = vmatpush.bf16.msra.mxu0 0
        %1611 = vmatpush.bf16.msra.mxu0 0
        %1612 = vmatpush.bf16.msra.mxu0 %v1603
        %1613 = vmatmul.bf16.gmra.mxu0 %v1600
        %v1614 = vpop.f32.mrf.mxu0
        %v1615 = vadd.f32 0.0, %v1614
        %v1616 = vpop.f32.mrf.mxu0
        %1617 = vdwg.mxu0
        %v1618 = vsel %vm805, %v1615, -inf
        %1619 = vmax.xlane.f32.xlu0 %v1618
        %v1620 = vpop.xlane.xlu0 %1619
        %v1621 = vsub.f32 %v1615, %v1620
        %v1622 = vmul.f32 %v1621, 1.442695
        %v1623 = vpow.pop %v1622
        %v1624 = vsel %vm805, %v1623, 0.0
        %1625 = vadd.xlane.f32.xlu0 %v1624
        %v1626 = vpop.xlane.xlu0 %1625
        %v1627 = vrcp.pop %v1626
        %v1628 = vmul.f32 %v1623, %v1627
        %v1629 = vpack.c.bf16 %v1628, %v1628
        %v1631 = vsel %vm805, %v1514, 0
        %v1634 = vsel %vm805, %v1629, 0
        %1636 = vmatpush.bf16.xpose.msra.mxu0 0
        %1637 = vmatpush.bf16.xpose.msra.mxu0 0
        %1638 = vmatpush.bf16.xpose.msra.mxu0 0
        %1639 = vmatpush.bf16.xpose.msra.mxu0 0
        %1640 = vmatpush.bf16.xpose.msra.mxu0 0
        %1641 = vmatpush.bf16.xpose.msra.mxu0 0
        %1642 = vmatpush.bf16.xpose.msra.mxu0 0
        %1643 = vmatpush.bf16.xpose.msra.mxu0 %v1634
        %1644 = vmatmul.bf16.gmra.mxu0 %v1631
        %v1645 = vpop.f32.mrf.mxu0
        %v1646 = vadd.f32 0.0, %v1645
        %v1647 = vpop.f32.mrf.mxu0
        %1648 = vdwg.mxu0
        %1649 = vxpose.xlu0.c.b16.start [1/8] %v1507, 128
        %1650 = vxpose.xlu0.c.b16.cont [2/8] 0, 128
        %1651 = vxpose.xlu0.c.b16.cont [3/8] 0, 128
        %1652 = vxpose.xlu0.c.b16.cont [4/8] 0, 128
        %1653 = vxpose.xlu0.c.b16.cont [5/8] 0, 128
        %1654 = vxpose.xlu0.c.b16.cont [6/8] 0, 128
        %1655 = vxpose.xlu0.c.b16.cont [7/8] 0, 128
        %1656 = vxpose.xlu0.c.b16.end [8/8] 0, 128
        %v1657 = vpop.trf.xlu0
        %v1658 = vpop.trf.xlu0
        %v1659 = vpop.trf.xlu0
        %v1660 = vpop.trf.xlu0
        %v1661 = vpop.trf.xlu0
        %v1662 = vpop.trf.xlu0
        %v1663 = vpop.trf.xlu0
        %v1664 = vpop.trf.xlu0
        %v1666 = vsel %vm805, %v1657, 0
        %v1669 = vsel %vm809, %v1511, 0
        %1671 = vmatpush.bf16.msra.mxu0 0
        %1672 = vmatpush.bf16.msra.mxu0 0
        %1673 = vmatpush.bf16.msra.mxu0 0
        %1674 = vmatpush.bf16.msra.mxu0 0
        %1675 = vmatpush.bf16.msra.mxu0 0
        %1676 = vmatpush.bf16.msra.mxu0 0
        %1677 = vmatpush.bf16.msra.mxu0 0
        %1678 = vmatpush.bf16.msra.mxu0 %v1669
        %1679 = vmatmul.bf16.gmra.mxu0 %v1666
        %v1680 = vpop.f32.mrf.mxu0
        %v1681 = vadd.f32 0.0, %v1680
        %v1682 = vpop.f32.mrf.mxu0
        %1683 = vdwg.mxu0
        %v1684 = vsel %vm805, %v1681, -inf
        %1685 = vmax.xlane.f32.xlu0 %v1684
        %v1686 = vpop.xlane.xlu0 %1685
        %v1687 = vsub.f32 %v1681, %v1686
        %v1688 = vmul.f32 %v1687, 1.442695
        %v1689 = vpow.pop %v1688
        %v1690 = vsel %vm805, %v1689, 0.0
        %1691 = vadd.xlane.f32.xlu0 %v1690
        %v1692 = vpop.xlane.xlu0 %1691
        %v1693 = vrcp.pop %v1692
        %v1694 = vmul.f32 %v1689, %v1693
        %v1695 = vpack.c.bf16 %v1694, %v1694
        %v1697 = vsel %vm805, %v1515, 0
        %v1700 = vsel %vm805, %v1695, 0
        %1702 = vmatpush.bf16.xpose.msra.mxu0 0
        %1703 = vmatpush.bf16.xpose.msra.mxu0 0
        %1704 = vmatpush.bf16.xpose.msra.mxu0 0
        %1705 = vmatpush.bf16.xpose.msra.mxu0 0
        %1706 = vmatpush.bf16.xpose.msra.mxu0 0
        %1707 = vmatpush.bf16.xpose.msra.mxu0 0
        %1708 = vmatpush.bf16.xpose.msra.mxu0 0
        %1709 = vmatpush.bf16.xpose.msra.mxu0 %v1700
        %1710 = vmatmul.bf16.gmra.mxu0 %v1697
        %v1711 = vpop.f32.mrf.mxu0
        %v1712 = vadd.f32 0.0, %v1711
        %v1713 = vpop.f32.mrf.mxu0
        %1714 = vdwg.mxu0
        %1715 = vxpose.xlu0.c.b16.start [1/8] %v1508, 128
        %1716 = vxpose.xlu0.c.b16.cont [2/8] 0, 128
        %1717 = vxpose.xlu0.c.b16.cont [3/8] 0, 128
        %1718 = vxpose.xlu0.c.b16.cont [4/8] 0, 128
        %1719 = vxpose.xlu0.c.b16.cont [5/8] 0, 128
        %1720 = vxpose.xlu0.c.b16.cont [6/8] 0, 128
        %1721 = vxpose.xlu0.c.b16.cont [7/8] 0, 128
        %1722 = vxpose.xlu0.c.b16.end [8/8] 0, 128
        %v1723 = vpop.trf.xlu0
        %v1724 = vpop.trf.xlu0
        %v1725 = vpop.trf.xlu0
        %v1726 = vpop.trf.xlu0
        %v1727 = vpop.trf.xlu0
        %v1728 = vpop.trf.xlu0
        %v1729 = vpop.trf.xlu0
        %v1730 = vpop.trf.xlu0
        %v1732 = vsel %vm805, %v1723, 0
        %v1735 = vsel %vm809, %v1512, 0
        %1737 = vmatpush.bf16.msra.mxu0 0
        %1738 = vmatpush.bf16.msra.mxu0 0
        %1739 = vmatpush.bf16.msra.mxu0 0
        %1740 = vmatpush.bf16.msra.mxu0 0
        %1741 = vmatpush.bf16.msra.mxu0 0
        %1742 = vmatpush.bf16.msra.mxu0 0
        %1743 = vmatpush.bf16.msra.mxu0 0
        %1744 = vmatpush.bf16.msra.mxu0 %v1735
        %1745 = vmatmul.bf16.gmra.mxu0 %v1732
        %v1746 = vpop.f32.mrf.mxu0
        %v1747 = vadd.f32 0.0, %v1746
        %v1748 = vpop.f32.mrf.mxu0
        %1749 = vdwg.mxu0
        %v1750 = vsel %vm805, %v1747, -inf
        %1751 = vmax.xlane.f32.xlu0 %v1750
        %v1752 = vpop.xlane.xlu0 %1751
        %v1753 = vsub.f32 %v1747, %v1752
        %v1754 = vmul.f32 %v1753, 1.442695
        %v1755 = vpow.pop %v1754
        %v1756 = vsel %vm805, %v1755, 0.0
        %1757 = vadd.xlane.f32.xlu0 %v1756
        %v1758 = vpop.xlane.xlu0 %1757
        %v1759 = vrcp.pop %v1758
        %v1760 = vmul.f32 %v1755, %v1759
        %v1761 = vpack.c.bf16 %v1760, %v1760
        %v1763 = vsel %vm805, %v1516, 0
        %v1766 = vsel %vm805, %v1761, 0
        %1768 = vmatpush.bf16.xpose.msra.mxu0 0
        %1769 = vmatpush.bf16.xpose.msra.mxu0 0
        %1770 = vmatpush.bf16.xpose.msra.mxu0 0
        %1771 = vmatpush.bf16.xpose.msra.mxu0 0
        %1772 = vmatpush.bf16.xpose.msra.mxu0 0
        %1773 = vmatpush.bf16.xpose.msra.mxu0 0
        %1774 = vmatpush.bf16.xpose.msra.mxu0 0
        %1775 = vmatpush.bf16.xpose.msra.mxu0 %v1766
        %1776 = vmatmul.bf16.gmra.mxu0 %v1763
        %v1777 = vpop.f32.mrf.mxu0
        %v1778 = vadd.f32 0.0, %v1777
        %v1779 = vpop.f32.mrf.mxu0
        %1780 = vdwg.mxu0
        %v1781 = vpack.c.bf16 %v1646, %v1580
        %v1782 = vpack.c.bf16 %v1778, %v1712
        %s1783 = scalar_lea.vmem %s7, 16
        %v1784 = vld [vmem:[%s1783] sm:$0xf]
        %v1785 = vld [vmem:[%s1783 + $0x4] sm:$0xf]
        %v1786 = vld [vmem:[%s1783 + $0x8] sm:$0xf]
        %v1787 = vld [vmem:[%s1783 + $0xc] sm:$0xf]
        %1788 = vxpose.xlu0.c.b16.start [1/8] %v1781, 128
        %1789 = vxpose.xlu0.c.b16.cont [2/8] %v1782, 128
        %1790 = vxpose.xlu0.c.b16.cont [3/8] 0, 128
        %1791 = vxpose.xlu0.c.b16.cont [4/8] 0, 128
        %1792 = vxpose.xlu0.c.b16.cont [5/8] 0, 128
        %1793 = vxpose.xlu0.c.b16.cont [6/8] 0, 128
        %1794 = vxpose.xlu0.c.b16.cont [7/8] 0, 128
        %1795 = vxpose.xlu0.c.b16.end [8/8] 0, 128
        %v1796 = vpop.trf.xlu0
        %v1797 = vpop.trf.xlu0
        %v1798 = vpop.trf.xlu0
        %v1799 = vpop.trf.xlu0
        %v1800 = vpop.trf.xlu0
        %v1801 = vpop.trf.xlu0
        %v1802 = vpop.trf.xlu0
        %v1803 = vpop.trf.xlu0
        %v1808 = vunpack.c.l.b16 %v1784
        %v1809 = vunpack.c.l.b16 %v1785
        %v1810 = vunpack.c.l.b16 %v1786
        %v1811 = vunpack.c.l.b16 %v1787
        %v1812 = vpack.c.b16 %v1809, %v1808
        %v1813 = vpack.c.b16 %v1811, %v1810
        %v1817 = vsel %vm561, %v1796, 0
        %1819 = vmatpush.bf16.msra.mxu0 0
        %1820 = vmatpush.bf16.msra.mxu0 0
        %1821 = vmatpush.bf16.msra.mxu0 0
        %1822 = vmatpush.bf16.msra.mxu0 0
        %1823 = vmatpush.bf16.msra.mxu0 0
        %1824 = vmatpush.bf16.msra.mxu0 0
        %1825 = vmatpush.bf16.msra.mxu0 %v1813
        %1826 = vmatpush.bf16.msra.mxu0 %v1812
        %1827 = vmatmul.bf16.gmra.mxu0 %v1817
        %v1828 = vpop.f32.mrf.mxu0
        %v1829 = vadd.f32 0.0, %v1828
        %v1830 = vpop.f32.mrf.mxu0
        %1831 = vdwg.mxu0
        %v1832 = vadd.f32 %v1294, %v1829
        %v1833 = vperm.slane %v384, 4
        %v1834 = vadd.f32 %v1832, %v1833
        %v1835 = vsel %vm561, %v1834, 0.0
        %1836 = vadd.xlane.f32.xlu0 %v1835
        %v1837 = vpop.xlane.xlu0 %1836
        %v1838 = vmul.f32 %v1837, %v571
        %v1839 = vmul.f32 %v1834, %v1834
        %v1840 = vsel %vm561, %v1839, 0.0
        %1841 = vadd.xlane.f32.xlu0 %v1840
        %v1842 = vpop.xlane.xlu0 %1841
        %v1843 = vmul.f32 %v1842, %v571
        %v1844 = vmul.f32 %v1838, %v1838
        %v1845 = vsub.f32 %v1843, %v1844
        %v1846 = vmax.f32 %v1845, 0.0
        %v1847 = vsub.f32 %v1834, %v1838
        %v1848 = vadd.f32 %v1846, 1e-05
        %v1849 = vrsqrt.pop %v1848
        %v1850 = vmul.f32 %v1849, %v1848
        %v1851 = vmul.f32 %v1850, %v1849
        %v1852 = vmul.f32 0.5, %v1851
        %v1853 = vsub.f32 1.5, %v1852
        %v1854 = vmul.f32 %v1849, %v1853
        %vm1855 = vweird.f32 %v1848
        %vm1856 = vweird.f32 %v1849
        %vm1857 = vmor %vm1855, %vm1856
        %v1858 = vsel %vm1857, %v1849, %v1854
        %v1859 = vmul.f32 %v1847, %v1858
        %v1860 = vperm.slane %v384, 2
        %v1861 = vmul.f32 %v1859, %v1860
        %v1862 = vperm.slane %v384, 3
        %v1863 = vadd.f32 %v1861, %v1862
        %v1864 = vpack.c.bf16 %v1863, %v1863
        %s1865 = scalar_lea.vmem %s8, 16
        %v1866 = vld [vmem:[%s1865] sm:$0xf]
        %v1867 = vld [vmem:[%s1865 + $0x4] sm:$0xf]
        %v1868 = vld [vmem:[%s1865 + $0x8] sm:$0xf]
        %v1869 = vld [vmem:[%s1865 + $0xc] sm:$0xf]
        %s1870 = scalar_lea.vmem %s5, 1
        %v1871 = vld [vmem:[%s1870] sm:$0x1]
        %v1873 = vperm.slane %v1871, 0
        %v1879 = vunpack.c.l.b16 %v1866
        %v1880 = vunpack.c.l.b16 %v1867
        %v1881 = vunpack.c.l.b16 %v1868
        %v1882 = vunpack.c.l.b16 %v1869
        %v1883 = vpack.c.b16 %v1880, %v1879
        %v1884 = vpack.c.b16 %v1882, %v1881
        %v1888 = vsel %vm561, %v1864, 0
        %1890 = vmatpush.bf16.msra.mxu0 0
        %1891 = vmatpush.bf16.msra.mxu0 0
        %1892 = vmatpush.bf16.msra.mxu0 0
        %1893 = vmatpush.bf16.msra.mxu0 0
        %1894 = vmatpush.bf16.msra.mxu0 0
        %1895 = vmatpush.bf16.msra.mxu0 0
        %1896 = vmatpush.bf16.msra.mxu0 %v1884
        %1897 = vmatpush.bf16.msra.mxu0 %v1883
        %1898 = vmatmul.bf16.gmra.mxu0 %v1888
        %v1899 = vpop.f32.mrf.mxu0
        %v1900 = vadd.f32 %v1873, %v1899
        %v1901 = vpop.f32.mrf.mxu0
        %1902 = vdwg.mxu0
        %v1903 = vmul.f32 %v1900, 0.70710677
        %v1904 = vand.u32 2147483647, %v1903
        %v1905 = vmul.f32 %v1904, 0.3275911
        %v1906 = vadd.f32 %v1905, 1.0
        %v1907 = vrcp.pop %v1906
        %v1908 = vmul.f32 %v1906, %v1907
        %v1909 = vsub.f32 1.0, %v1908
        %v1910 = vmul.f32 %v1907, %v1909
        %v1911 = vadd.f32 %v1907, %v1910
        %vm1912 = vweird.f32 %v1906
        %vm1913 = vweird.f32 %v1907
        %vm1914 = vmor %vm1912, %vm1913
        %v1915 = vsel %vm1914, %v1907, %v1911
        %v1916 = vand.u32 2147483647, %v1906
        %vm1917 = vcmp.eq.f32.partialorder %v1916, 8.507059e+37
        %v1918 = vand.u32 %v1906, 2147483648
        %v1919 = vor.u32 1.1754944e-38, %v1918
        %v1920 = vsel %vm1917, %v1919, %v1915
        %v1921 = vmul.f32 1.0, %v1920
        %v1922 = vmul.f32 %v1921, 1.0614054
        %v1923 = vsub.f32 %v1922, 1.4531521
        %v1924 = vmul.f32 %v1923, %v1921
        %v1925 = vadd.f32 %v1924, 1.4214138
        %v1926 = vmul.f32 %v1925, %v1921
        %v1927 = vsub.f32 %v1926, 0.28449672
        %v1928 = vmul.f32 %v1927, %v1921
        %v1929 = vadd.f32 %v1928, 0.2548296
        %v1930 = vmul.f32 %v1929, %v1921
        %v1931 = vsub.f32 0.0, %v1904
        %v1932 = vmul.f32 %v1931, %v1904
        %v1933 = vmul.f32 %v1932, 1.442695
        %v1934 = vpow.pop %v1933
        %v1935 = vmul.f32 %v1930, %v1934
        %v1936 = vsub.f32 1.0, %v1935
        %vm1937 = vcmp.ge.f32.partialorder %v1903, 0.0
        %v1938 = vsub.f32 0.0, %v1936
        %v1939 = vsel %vm1937, %v1936, %v1938
        %v1940 = vmul.f32 %v1900, 0.5
        %v1941 = vadd.f32 %v1939, 1.0
        %v1942 = vmul.f32 %v1940, %v1941
        %v1943 = vpack.c.bf16 %v1942, %v1942
        %s1944 = scalar_lea.vmem %s9, 64
        %v1945 = vld [vmem:[%s1944] sm:$0xf]
        %v1946 = vld [vmem:[%s1944 + $0x4] sm:$0xf]
        %v1947 = vld [vmem:[%s1944 + $0x8] sm:$0xf]
        %v1948 = vld [vmem:[%s1944 + $0xc] sm:$0xf]
        %v1949 = vld [vmem:[%s1944 + $0x10] sm:$0xf]
        %v1950 = vld [vmem:[%s1944 + $0x14] sm:$0xf]
        %v1951 = vld [vmem:[%s1944 + $0x18] sm:$0xf]
        %v1952 = vld [vmem:[%s1944 + $0x1c] sm:$0xf]
        %v1953 = vld [vmem:[%s1944 + $0x20] sm:$0xf]
        %v1954 = vld [vmem:[%s1944 + $0x24] sm:$0xf]
        %v1955 = vld [vmem:[%s1944 + $0x28] sm:$0xf]
        %v1956 = vld [vmem:[%s1944 + $0x2c] sm:$0xf]
        %v1957 = vld [vmem:[%s1944 + $0x30] sm:$0xf]
        %v1958 = vld [vmem:[%s1944 + $0x34] sm:$0xf]
        %v1959 = vld [vmem:[%s1944 + $0x38] sm:$0xf]
        %v1960 = vld [vmem:[%s1944 + $0x3c] sm:$0xf]
        %v1977 = vunpack.c.l.b16 %v1945
        %v1978 = vunpack.c.l.b16 %v1946
        %v1979 = vunpack.c.l.b16 %v1947
        %v1980 = vunpack.c.l.b16 %v1948
        %v1981 = vunpack.c.l.b16 %v1949
        %v1982 = vunpack.c.l.b16 %v1950
        %v1983 = vunpack.c.l.b16 %v1951
        %v1984 = vunpack.c.l.b16 %v1952
        %v1985 = vunpack.c.l.b16 %v1953
        %v1986 = vunpack.c.l.b16 %v1954
        %v1987 = vunpack.c.l.b16 %v1955
        %v1988 = vunpack.c.l.b16 %v1956
        %v1989 = vunpack.c.l.b16 %v1957
        %v1990 = vunpack.c.l.b16 %v1958
        %v1991 = vunpack.c.l.b16 %v1959
        %v1992 = vunpack.c.l.b16 %v1960
        %v1993 = vpack.c.b16 %v1978, %v1977
        %v1994 = vpack.c.b16 %v1980, %v1979
        %v1995 = vpack.c.b16 %v1982, %v1981
        %v1996 = vpack.c.b16 %v1984, %v1983
        %v1997 = vpack.c.b16 %v1986, %v1985
        %v1998 = vpack.c.b16 %v1988, %v1987
        %v1999 = vpack.c.b16 %v1990, %v1989
        %v2000 = vpack.c.b16 %v1992, %v1991
        %2009 = vmatpush.bf16.msra.mxu0 %v2000
        %2010 = vmatpush.bf16.msra.mxu0 %v1999
        %2011 = vmatpush.bf16.msra.mxu0 %v1998
        %2012 = vmatpush.bf16.msra.mxu0 %v1997
        %2013 = vmatpush.bf16.msra.mxu0 %v1996
        %2014 = vmatpush.bf16.msra.mxu0 %v1995
        %2015 = vmatpush.bf16.msra.mxu0 %v1994
        %2016 = vmatpush.bf16.msra.mxu0 %v1993
        %2017 = vmatmul.bf16.gmra.mxu0 %v1943
        %v2018 = vpop.f32.mrf.mxu0
        %v2019 = vadd.f32 0.0, %v2018
        %v2020 = vpop.f32.mrf.mxu0
        %2021 = vdwg.mxu0
        %v2022 = vadd.f32 %v1834, %v2019
        %v2023 = vperm.slane %v384, 5
        %v2024 = vadd.f32 %v2022, %v2023
        %v2025 = vsel %vm561, %v2024, 0.0
        %2026 = vadd.xlane.f32.xlu0 %v2025
        %v2027 = vpop.xlane.xlu0 %2026
        %v2028 = vmul.f32 %v2027, %v571
        %v2029 = vmul.f32 %v2024, %v2024
        %v2030 = vsel %vm561, %v2029, 0.0
        %2031 = vadd.xlane.f32.xlu0 %v2030
        %v2032 = vpop.xlane.xlu0 %2031
        %v2033 = vmul.f32 %v2032, %v571
        %v2034 = vmul.f32 %v2028, %v2028
        %v2035 = vsub.f32 %v2033, %v2034
        %v2036 = vmax.f32 %v2035, 0.0
        %v2037 = vsub.f32 %v2024, %v2028
        %v2038 = vadd.f32 %v2036, 1e-05
        %v2039 = vrsqrt.pop %v2038
        %v2040 = vmul.f32 %v2039, %v2038
        %v2041 = vmul.f32 %v2040, %v2039
        %v2042 = vmul.f32 0.5, %v2041
        %v2043 = vsub.f32 1.5, %v2042
        %v2044 = vmul.f32 %v2039, %v2043
        %vm2045 = vweird.f32 %v2038
        %vm2046 = vweird.f32 %v2039
        %vm2047 = vmor %vm2045, %vm2046
        %v2048 = vsel %vm2047, %v2039, %v2044
        %v2049 = vmul.f32 %v2037, %v2048
        %v2050 = vperm.slane %v383, 6
        %v2051 = vmul.f32 %v2049, %v2050
        %v2052 = vperm.slane %v383, 7
        %v2053 = vadd.f32 %v2051, %v2052
        %v2054 = vpack.c.bf16 %v2053, %v2053
        %v2055 = vld [vmem:[%s10] sm:$0xf]
        %v2056 = vld [vmem:[%s10 + $0x4] sm:$0xf]
        %v2057 = vld [vmem:[%s10 + $0x8] sm:$0xf]
        %v2058 = vld [vmem:[%s10 + $0xc] sm:$0xf]
        %v2063 = vunpack.c.l.b16 %v2055
        %v2064 = vunpack.c.l.b16 %v2056
        %v2065 = vunpack.c.l.b16 %v2057
        %v2066 = vunpack.c.l.b16 %v2058
        %v2067 = vpack.c.b16 %v2064, %v2063
        %v2068 = vpack.c.b16 %v2066, %v2065
        %v2072 = vsel %vm561, %v2054, 0
        %2074 = vmatpush.bf16.msra.mxu0 0
        %2075 = vmatpush.bf16.msra.mxu0 0
        %2076 = vmatpush.bf16.msra.mxu0 0
        %2077 = vmatpush.bf16.msra.mxu0 0
        %2078 = vmatpush.bf16.msra.mxu0 0
        %2079 = vmatpush.bf16.msra.mxu0 0
        %2080 = vmatpush.bf16.msra.mxu0 %v2068
        %2081 = vmatpush.bf16.msra.mxu0 %v2067
        %2082 = vmatmul.bf16.gmra.mxu0 %v2072
        %v2083 = vpop.f32.mrf.mxu0
        %v2084 = vadd.f32 0.0, %v2083
        %v2085 = vpop.f32.mrf.mxu0
        %2086 = vdwg.mxu0
        %2087 = vst [vmem:[%s377] sm:$0xff] %v2084
        %s2088 = sand.u32 %s269, 1
        %s2089 = scalar_lea.sflag [#allocation3], %s2088
        %s2090 = sand.u32 %s269, 1
        %s2091 = smul.addr %s2090, 8
        %s2092 = scalar_lea.vmem [#allocation2], %s2091
        // Predicated region
        $region65: #{tpu_custom_call.1} parent=63 // pred_check
          %p2093 = pneg %p279
        $region66: #{tpu_custom_call.1} parent=63 // pred_check_branch
          %2095 = sbr.rel (%p2093) target = $region68
        $region67: #{tpu_custom_call.1} parent=63 // pred_region
          %2097 = vsyncadd %s2089, 0
          %s2098 = smul.addr %s25, 8
          %s2099 = scalar_lea.hbm %s11, %s2098
          %s2101 = sshll.u32 %s2092, 4
          %s2102 = int_to_ptr.vmem [resolvable:$true] %s2101
          %s2103 = sshll.u32 %s2099, 4
          %s2104 = int_to_ptr.hbm [resolvable:$true] %s2103
          %2106 = dma.vmem_to_hbm [thread:$0]  %s2102, 128, %s2104, %s2089
        $region68: #{tpu_custom_call.1} parent=63 // pred_fallthru
          _
      $region64: #{tpu_custom_call.1} parent=5 // pred_fallthru
        _
      %p2107 = scmp.le.s32.totalorder 2, %s20
      // Predicated region
      $region69: #{tpu_custom_call.1} parent=5 // pred_check
        %p2108 = pneg %p2107
      $region70: #{tpu_custom_call.1} parent=5 // pred_check_branch
        %2110 = sbr.rel (%p2108) target = $region72
      $region71: #{tpu_custom_call.1} parent=5 // pred_region
        %s2111 = ssub.s32 %s20, 2
        // Predicated region
        $region73: #{tpu_custom_call.1} parent=71 // pred_check
          %p2112 = pneg %p285
        $region74: #{tpu_custom_call.1} parent=71 // pred_check_branch
          %2114 = sbr.rel (%p2112) target = $region76
        $region75: #{tpu_custom_call.1} parent=71 // pred_region
          %s2115 = sand.u32 %s270, 1
          %s2116 = scalar_lea.sflag [#allocation3], %s2115
          %s2117 = sand.u32 %s270, 1
          %s2118 = smul.addr %s2117, 8
          %s2119 = scalar_lea.vmem [#allocation2], %s2118
          %2121 = dma.done %s2116, 128
        $region76: #{tpu_custom_call.1} parent=71 // pred_fallthru
          _
      $region72: #{tpu_custom_call.1} parent=5 // pred_fallthru
        _
    $region6: #{tpu_custom_call.1} parent=1 // loop_footer
      %s24 = sadd.s32 1, %s20
    $region7: #{tpu_custom_call.1} parent=1 // loop_footer_branch
      %19 = sbr.rel target = $region3
    $region8: #{tpu_custom_call.1} parent=1 // loop_exit
      _
    %2122 = vsyncpa [#allocation3], 1
    %s2123 = scalar_lea.sflag [#allocation3], 1
    %2124 = vsyncpa %s2123, 1

</llo_original>
